<compile_context>
chip_gen: v7x
topology: tpu7x:2x2x1
jax: 0.10.0
libtpu: 0.0.40
codegen_flags: <defaults>
</compile_context>

<pallas_src>
import math

import jax
import jax.numpy as jnp
from jax.experimental import pallas as pl
from jax.experimental.pallas import tpu as pltpu

SIGMA = 3.0             # self.sigma in the reference module
LEAKY_SLOPE = 0.01      # nn.LeakyReLU default
INV_SQRT_D = 1.0 / math.sqrt(128.0)


def _leaky_relu(x, slope=LEAKY_SLOPE):
    return jnp.where(x > 0, x, slope * x)


def _wp_attention_kernel(
    # activations
    bev_ref,              # (B, 256) f32   bev_encoder output
    meas_ref,             # (B, 8)   f32   measurement padded 7 -> 8
    wpx_ref, wpy_ref,     # (B, N)   f32   waypoint x / y
    ax_ref, ay_ref,       # (B, A)   f32   actor x / y
    # weights (big ones in bf16, biases + tiny ones in f32)
    qe_w1a_ref,           # (256, 512) bf16   query_encoder[0] rows [:256]
    qe_w1b_ref,           # (8, 512)   bf16   query_encoder[0] rows [256:263] + zero row
    qe_b1_ref,            # (1, 512)   f32
    qe_w2_ref, qe_b2_ref, # (512, 256) bf16, (1, 256) f32
    wq_w_ref, wq_b_ref,   # (256, 128) bf16, (1, 128) f32
    we_w1_ref, we_b1_ref, # (2, 128)   f32,  (1, 128) f32
    we_w2_ref, we_b2_ref, # (128, 64)  bf16, (1, 64)  f32
    wk_w_ref, wk_b_ref,   # (64, 128)  bf16, (1, 128) f32
    # outputs
    score_ref,            # (B, N) f32  VMEM  softmax attention weights
    entropy_ref,          # (1, 1) f32  SMEM
    rank_ref,             # (1, 1) f32  SMEM
):
    f32 = jnp.float32
    bf16 = jnp.bfloat16

    # ---- query path: split-K first linear -> LeakyReLU -> Linear -> W_q ----
    h = (jnp.dot(bev_ref[...].astype(bf16), qe_w1a_ref[...], preferred_element_type=f32)
         + jnp.dot(meas_ref[...].astype(bf16), qe_w1b_ref[...], preferred_element_type=f32)
         + qe_b1_ref[...])
    h = _leaky_relu(h)
    q = jnp.dot(h.astype(bf16), qe_w2_ref[...], preferred_element_type=f32) + qe_b2_ref[...]
    q = jnp.dot(q.astype(bf16), wq_w_ref[...], preferred_element_type=f32) + wq_b_ref[...]   # (B, 128)

    # ---- key path: Linear(2,128) as a lane-dense VPU outer product ---------
    wpx = wpx_ref[...]
    wpy = wpy_ref[...]
    B, N = wpx.shape
    w1 = we_w1_ref[...]                         # (2, 128) f32
    w1x = w1[0:1, :]                            # (1, 128)
    w1y = w1[1:2, :]                            # (1, 128)
    k = (wpx[:, :, None] * w1x[None, :, :]
         + wpy[:, :, None] * w1y[None, :, :]
         + we_b1_ref[...][None, :, :])          # (B, N, 128)
    k = _leaky_relu(k)
    kf = k.reshape(B * N, 128)
    kf = jnp.dot(kf.astype(bf16), we_w2_ref[...], preferred_element_type=f32) + we_b2_ref[...]  # (B*N, 64)
    kf = jnp.dot(kf.astype(bf16), wk_w_ref[...], preferred_element_type=f32) + wk_b_ref[...]    # (B*N, 128)
    key = kf.reshape(B, N, 128)

    # ---- attention scores (batched MXU contraction) + softmax --------------
    s = jnp.einsum("bqd,bkd->bqk", q[:, None, :], key,
                   preferred_element_type=f32)          # (B, 1, N)
    score = s.reshape(B, N) * INV_SQRT_D
    m = jnp.max(score, axis=1, keepdims=True)
    e = jnp.exp(score - m)
    sm = e / jnp.sum(e, axis=1, keepdims=True)          # (B, N)

    # ---- RBF kernel density of actors around each waypoint (lane-dense) ----
    ax = ax_ref[...]
    ay = ay_ref[...]
    dx = wpx[:, :, None] - ax[:, None, :]               # (B, N, A)
    dy = wpy[:, :, None] - ay[:, None, :]
    d2 = dx * dx + dy * dy                              # squared euclidean = cdist^2
    kern = jnp.exp(d2 * (-1.0 / (2.0 * SIGMA * SIGMA)))
    mask = ((ax + ay) != 0.0).astype(f32)               # == (actor.sum(-1) != 0), as in reference
    kern = kern * mask[:, None, :]
    norm_vals = jnp.sum(kern, axis=-1)                  # (B, N)

    # ---- pairwise ranking hinge loss ----------------------------------------
    diff = norm_vals[:, :, None] - norm_vals[:, None, :]            # (B, N, N)
    labels = jnp.where(diff > 0, 1.0, jnp.where(diff < 0, -1.0, 0.0))  # torch.sign
    sdiff = sm[:, :, None] - sm[:, None, :]
    rank_loss = jnp.mean(jnp.maximum(0.0, -labels * sdiff + 0.1))

    # ---- entropy term (same sign convention as the reference) ---------------
    ent_rows = jnp.sum(sm * jnp.log(sm + 1e-8), axis=1, keepdims=True)   # (B, 1)
    entropy = jnp.sum(ent_rows) / B

    score_ref[...] = sm
    entropy_ref[0, 0] = entropy
    rank_ref[0, 0] = rank_loss


# ----------------------------------------------------------------------------
# Glue: parameter init + BEV encoder stand-in + pallas_call wrapper
# ----------------------------------------------------------------------------
def _linear_init(key, fan_in, fan_out):
    kw, kb = jax.random.split(key)
    bound = 1.0 / math.sqrt(fan_in)
    w = jax.random.uniform(kw, (fan_in, fan_out), jnp.float32, -bound, bound)
    b = jax.random.uniform(kb, (1, fan_out), jnp.float32, -bound, bound)
    return w, b


def init_params(key, c_bev):
    ks = jax.random.split(key, 7)
    p = {}
    p["bev_w"], p["bev_b"] = _linear_init(ks[0], c_bev + 2, 256)    # BEV stand-in

    # query_encoder[0]: Linear(263, 512), split K = 256 + 7(+1 zero pad), bf16
    qe_w1, p["qe_b1"] = _linear_init(ks[1], 7 + 256, 512)
    p["qe_w1a"] = qe_w1[:256].astype(jnp.bfloat16)                              # (256, 512)
    p["qe_w1b"] = jnp.pad(qe_w1[256:], ((0, 1), (0, 0))).astype(jnp.bfloat16)   # (8, 512)

    qe_w2, p["qe_b2"] = _linear_init(ks[2], 512, 256)               # query_encoder[2]
    p["qe_w2"] = qe_w2.astype(jnp.bfloat16)
    wq_w, p["wq_b"] = _linear_init(ks[3], 256, 128)                 # W_q
    p["wq_w"] = wq_w.astype(jnp.bfloat16)
    p["we_w1"], p["we_b1"] = _linear_init(ks[4], 2, 128)            # wp_encoder[0] (tiny, f32)
    we_w2, p["we_b2"] = _linear_init(ks[5], 128, 64)                # wp_encoder[2]
    p["we_w2"] = we_w2.astype(jnp.bfloat16)
    wk_w, p["wk_b"] = _linear_init(ks[6], 64, 128)                  # W_k
    p["wk_w"] = wk_w.astype(jnp.bfloat16)
    return p


def _bev_encode_standin(bev, w, b):
    # TODO(synk): resnet6e is external/undefined in the reference; replaced with a
    # deterministic stand-in (coord-grid concat + global mean pool + linear -> 256).
    B, C, H, W = bev.shape
    x = jnp.linspace(-18.0, 18.0, H)
    y = jnp.linspace(-18.0, 18.0, W)
    xx, yy = jnp.meshgrid(x, y, indexing="ij")                      # torch.meshgrid 'ij'
    coords = jnp.broadcast_to(jnp.stack([xx, yy])[None], (B, 2, H, W))
    z = jnp.concatenate([bev, coords], axis=1)                      # (B, C+2, H, W) NCHW
    pooled = jnp.mean(z, axis=(2, 3))                               # (B, C+2)
    return pooled @ w + b                                           # (B, 256)


@jax.jit
def wp_attention_forward(wp, bev, measurement, actor_pos, params):
    bev_feat = _bev_encode_standin(bev, params["bev_w"], params["bev_b"])     # (B, 256)
    meas_pad = jnp.pad(measurement.astype(jnp.float32), ((0, 0), (0, 1)))     # (B, 8)

    wp = wp.astype(jnp.float32)
    actor = actor_pos.astype(jnp.float32)
    wpx, wpy = wp[..., 0], wp[..., 1]                                         # (B, N)
    ax, ay = actor[..., 0], actor[..., 1]                                     # (B, A)
    B, N = wpx.shape

    ins = (
        bev_feat, meas_pad, wpx, wpy, ax, ay,
        params["qe_w1a"], params["qe_w1b"], params["qe_b1"],
        params["qe_w2"], params["qe_b2"],
        params["wq_w"], params["wq_b"],
        params["we_w1"], params["we_b1"],
        params["we_w2"], params["we_b2"],
        params["wk_w"], params["wk_b"],
    )

    out_shape = (
        jax.ShapeDtypeStruct((B, N), jnp.float32),
        jax.ShapeDtypeStruct((1, 1), jnp.float32),
        jax.ShapeDtypeStruct((1, 1), jnp.float32),
    )
    out_specs = (
        pl.BlockSpec(memory_space=pltpu.VMEM),
        pl.BlockSpec(memory_space=pltpu.SMEM),
        pl.BlockSpec(memory_space=pltpu.SMEM),
    )

    # No grid: single invocation, whole (tiny) arrays resident in VMEM, no
    # useless double-buffering of the weights.
    score, entropy, rank = pl.pallas_call(
        _wp_attention_kernel,
        out_shape=out_shape,
        in_specs=[pl.BlockSpec(memory_space=pltpu.VMEM)] * len(ins),
        out_specs=out_specs,
    )(*ins)

    return score, entropy[0, 0], rank[0, 0]


if __name__ == "__main__":
    key = jax.random.PRNGKey(0)
    B, C_BEV, H, W = 2, 4, 180, 180
    N_WP, N_ACT = 8, 4

    keys = jax.random.split(key, 5)
    bev = jax.random.normal(keys[0], (B, C_BEV, H, W), jnp.float32)
    measurement = jax.random.normal(keys[1], (B, 7), jnp.float32)
    wp = jax.random.uniform(keys[2], (B, N_WP, 2), jnp.float32, -10.0, 10.0)
    actor_pos = jax.random.uniform(keys[3], (B, N_ACT, 2), jnp.float32, -10.0, 10.0)
    actor_pos = actor_pos.at[:, -1, :].set(0.0)   # exercise the zero-actor mask

    params = init_params(keys[4], C_BEV)

    score, entropy, rank_loss = wp_attention_forward(wp, bev, measurement, actor_pos, params)
    jax.block_until_ready((score, entropy, rank_loss))

    assert score.shape == (B, N_WP)
    assert entropy.shape == () and rank_loss.shape == ()
    assert bool(jnp.all(jnp.abs(jnp.sum(score, axis=1) - 1.0) < 1e-3))  # softmax rows sum to 1
    print("KERNEL_OK")
</pallas_src>

<mosaic_0001>
module attributes {stable_mosaic.version = 11 : i64} {
  func.func @_wp_attention_kernel(%arg0: memref<2x256xf32, #tpu.memory_space<vmem>>, %arg1: memref<2x8xf32, #tpu.memory_space<vmem>>, %arg2: memref<2x8xf32, #tpu.memory_space<vmem>>, %arg3: memref<2x8xf32, #tpu.memory_space<vmem>>, %arg4: memref<2x4xf32, #tpu.memory_space<vmem>>, %arg5: memref<2x4xf32, #tpu.memory_space<vmem>>, %arg6: memref<256x512xbf16, #tpu.memory_space<vmem>>, %arg7: memref<8x512xbf16, #tpu.memory_space<vmem>>, %arg8: memref<1x512xf32, #tpu.memory_space<vmem>>, %arg9: memref<512x256xbf16, #tpu.memory_space<vmem>>, %arg10: memref<1x256xf32, #tpu.memory_space<vmem>>, %arg11: memref<256x128xbf16, #tpu.memory_space<vmem>>, %arg12: memref<1x128xf32, #tpu.memory_space<vmem>>, %arg13: memref<2x128xf32, #tpu.memory_space<vmem>>, %arg14: memref<1x128xf32, #tpu.memory_space<vmem>>, %arg15: memref<128x64xbf16, #tpu.memory_space<vmem>>, %arg16: memref<1x64xf32, #tpu.memory_space<vmem>>, %arg17: memref<64x128xbf16, #tpu.memory_space<vmem>>, %arg18: memref<1x128xf32, #tpu.memory_space<vmem>>, %arg19: memref<2x8xf32, #tpu.memory_space<vmem>>, %arg20: memref<1x1xf32, #tpu.memory_space<smem>>, %arg21: memref<1x1xf32, #tpu.memory_space<smem>>) attributes {dimension_semantics = [], scalar_prefetch = 0 : i64, scratch_operands = 0 : i64, tpu.core_type = #tpu.core_type<tc>} {
    %c0 = arith.constant 0 : index
    %c0_0 = arith.constant 0 : index
    %0 = vector.load %arg0[%c0, %c0_0] : memref<2x256xf32, #tpu.memory_space<vmem>>, vector<2x256xf32>
    %1 = arith.truncf %0 : vector<2x256xf32> to vector<2x256xbf16>
    %c0_1 = arith.constant 0 : index
    %c0_2 = arith.constant 0 : index
    %2 = vector.load %arg6[%c0_1, %c0_2] : memref<256x512xbf16, #tpu.memory_space<vmem>>, vector<256x512xbf16>
    %cst = arith.constant dense<0.000000e+00> : vector<2x512xf32>
    %3 = tpu.matmul %1, %2, %cst {dimension_numbers = #tpu.dot_dimension_numbers<[1], [0], [0], [1], [0, 0, 1, 1], [], []>} : vector<2x256xbf16>, vector<256x512xbf16>, vector<2x512xf32> -> vector<2x512xf32>
    %c0_3 = arith.constant 0 : index
    %c0_4 = arith.constant 0 : index
    %4 = vector.load %arg1[%c0_3, %c0_4] : memref<2x8xf32, #tpu.memory_space<vmem>>, vector<2x8xf32>
    %5 = arith.truncf %4 : vector<2x8xf32> to vector<2x8xbf16>
    %c0_5 = arith.constant 0 : index
    %c0_6 = arith.constant 0 : index
    %6 = vector.load %arg7[%c0_5, %c0_6] : memref<8x512xbf16, #tpu.memory_space<vmem>>, vector<8x512xbf16>
    %cst_7 = arith.constant dense<0.000000e+00> : vector<2x512xf32>
    %7 = tpu.matmul %5, %6, %cst_7 {dimension_numbers = #tpu.dot_dimension_numbers<[1], [0], [0], [1], [0, 0, 1, 1], [], []>} : vector<2x8xbf16>, vector<8x512xbf16>, vector<2x512xf32> -> vector<2x512xf32>
    %8 = arith.addf %3, %7 : vector<2x512xf32>
    %c0_8 = arith.constant 0 : index
    %c0_9 = arith.constant 0 : index
    %9 = vector.load %arg8[%c0_8, %c0_9] : memref<1x512xf32, #tpu.memory_space<vmem>>, vector<1x512xf32>
    %10 = vector.broadcast %9 : vector<1x512xf32> to vector<2x512xf32>
    %11 = arith.addf %8, %10 : vector<2x512xf32>
    %cst_10 = arith.constant 0.000000e+00 : f32
    %12 = vector.broadcast %cst_10 : f32 to vector<2x512xf32>
    %13 = arith.cmpf ogt, %11, %12 : vector<2x512xf32>
    %cst_11 = arith.constant 0.00999999977 : f32
    %14 = vector.broadcast %cst_11 : f32 to vector<2x512xf32>
    %15 = arith.mulf %14, %11 : vector<2x512xf32>
    %16 = arith.select %13, %11, %15 : vector<2x512xi1>, vector<2x512xf32>
    %17 = arith.truncf %16 : vector<2x512xf32> to vector<2x512xbf16>
    %c0_12 = arith.constant 0 : index
    %c0_13 = arith.constant 0 : index
    %18 = vector.load %arg9[%c0_12, %c0_13] : memref<512x256xbf16, #tpu.memory_space<vmem>>, vector<512x256xbf16>
    %cst_14 = arith.constant dense<0.000000e+00> : vector<2x256xf32>
    %19 = tpu.matmul %17, %18, %cst_14 {dimension_numbers = #tpu.dot_dimension_numbers<[1], [0], [0], [1], [0, 0, 1, 1], [], []>} : vector<2x512xbf16>, vector<512x256xbf16>, vector<2x256xf32> -> vector<2x256xf32>
    %c0_15 = arith.constant 0 : index
    %c0_16 = arith.constant 0 : index
    %20 = vector.load %arg10[%c0_15, %c0_16] : memref<1x256xf32, #tpu.memory_space<vmem>>, vector<1x256xf32>
    %21 = vector.broadcast %20 : vector<1x256xf32> to vector<2x256xf32>
    %22 = arith.addf %19, %21 : vector<2x256xf32>
    %23 = arith.truncf %22 : vector<2x256xf32> to vector<2x256xbf16>
    %c0_17 = arith.constant 0 : index
    %c0_18 = arith.constant 0 : index
    %24 = vector.load %arg11[%c0_17, %c0_18] : memref<256x128xbf16, #tpu.memory_space<vmem>>, vector<256x128xbf16>
    %cst_19 = arith.constant dense<0.000000e+00> : vector<2x128xf32>
    %25 = tpu.matmul %23, %24, %cst_19 {dimension_numbers = #tpu.dot_dimension_numbers<[1], [0], [0], [1], [0, 0, 1, 1], [], []>} : vector<2x256xbf16>, vector<256x128xbf16>, vector<2x128xf32> -> vector<2x128xf32>
    %c0_20 = arith.constant 0 : index
    %c0_21 = arith.constant 0 : index
    %26 = vector.load %arg12[%c0_20, %c0_21] : memref<1x128xf32, #tpu.memory_space<vmem>>, vector<1x128xf32>
    %27 = vector.broadcast %26 : vector<1x128xf32> to vector<2x128xf32>
    %28 = arith.addf %25, %27 : vector<2x128xf32>
    %c0_22 = arith.constant 0 : index
    %c0_23 = arith.constant 0 : index
    %29 = vector.load %arg2[%c0_22, %c0_23] : memref<2x8xf32, #tpu.memory_space<vmem>>, vector<2x8xf32>
    %c0_24 = arith.constant 0 : index
    %c0_25 = arith.constant 0 : index
    %30 = vector.load %arg3[%c0_24, %c0_25] : memref<2x8xf32, #tpu.memory_space<vmem>>, vector<2x8xf32>
    %c0_26 = arith.constant 0 : index
    %c0_27 = arith.constant 0 : index
    %31 = vector.load %arg13[%c0_26, %c0_27] : memref<2x128xf32, #tpu.memory_space<vmem>>, vector<2x128xf32>
    %32 = vector.extract_strided_slice %31 {offsets = [0, 0], sizes = [1, 128], strides = [1, 1]} : vector<2x128xf32> to vector<1x128xf32>
    %33 = vector.extract_strided_slice %31 {offsets = [1, 0], sizes = [1, 128], strides = [1, 1]} : vector<2x128xf32> to vector<1x128xf32>
    %34 = vector.shape_cast %29 : vector<2x8xf32> to vector<2x8x1xf32>
    %35 = vector.shape_cast %32 : vector<1x128xf32> to vector<1x1x128xf32>
    %36 = vector.broadcast %34 : vector<2x8x1xf32> to vector<2x8x128xf32>
    %37 = vector.broadcast %35 : vector<1x1x128xf32> to vector<2x8x128xf32>
    %38 = arith.mulf %36, %37 : vector<2x8x128xf32>
    %39 = vector.shape_cast %30 : vector<2x8xf32> to vector<2x8x1xf32>
    %40 = vector.shape_cast %33 : vector<1x128xf32> to vector<1x1x128xf32>
    %41 = vector.broadcast %39 : vector<2x8x1xf32> to vector<2x8x128xf32>
    %42 = vector.broadcast %40 : vector<1x1x128xf32> to vector<2x8x128xf32>
    %43 = arith.mulf %41, %42 : vector<2x8x128xf32>
    %44 = arith.addf %38, %43 : vector<2x8x128xf32>
    %c0_28 = arith.constant 0 : index
    %c0_29 = arith.constant 0 : index
    %45 = vector.load %arg14[%c0_28, %c0_29] : memref<1x128xf32, #tpu.memory_space<vmem>>, vector<1x128xf32>
    %46 = vector.shape_cast %45 : vector<1x128xf32> to vector<1x1x128xf32>
    %47 = vector.broadcast %46 : vector<1x1x128xf32> to vector<2x8x128xf32>
    %48 = arith.addf %44, %47 : vector<2x8x128xf32>
    %cst_30 = arith.constant 0.000000e+00 : f32
    %49 = vector.broadcast %cst_30 : f32 to vector<2x8x128xf32>
    %50 = arith.cmpf ogt, %48, %49 : vector<2x8x128xf32>
    %cst_31 = arith.constant 0.00999999977 : f32
    %51 = vector.broadcast %cst_31 : f32 to vector<2x8x128xf32>
    %52 = arith.mulf %51, %48 : vector<2x8x128xf32>
    %53 = arith.select %50, %48, %52 : vector<2x8x128xi1>, vector<2x8x128xf32>
    %54 = vector.shape_cast %53 : vector<2x8x128xf32> to vector<16x128xf32>
    %55 = arith.truncf %54 : vector<16x128xf32> to vector<16x128xbf16>
    %c0_32 = arith.constant 0 : index
    %c0_33 = arith.constant 0 : index
    %56 = vector.load %arg15[%c0_32, %c0_33] : memref<128x64xbf16, #tpu.memory_space<vmem>>, vector<128x64xbf16>
    %cst_34 = arith.constant dense<0.000000e+00> : vector<16x64xf32>
    %57 = tpu.matmul %55, %56, %cst_34 {dimension_numbers = #tpu.dot_dimension_numbers<[1], [0], [0], [1], [0, 0, 1, 1], [], []>} : vector<16x128xbf16>, vector<128x64xbf16>, vector<16x64xf32> -> vector<16x64xf32>
    %c0_35 = arith.constant 0 : index
    %c0_36 = arith.constant 0 : index
    %58 = vector.load %arg16[%c0_35, %c0_36] : memref<1x64xf32, #tpu.memory_space<vmem>>, vector<1x64xf32>
    %59 = vector.broadcast %58 : vector<1x64xf32> to vector<16x64xf32>
    %60 = arith.addf %57, %59 : vector<16x64xf32>
    %61 = arith.truncf %60 : vector<16x64xf32> to vector<16x64xbf16>
    %c0_37 = arith.constant 0 : index
    %c0_38 = arith.constant 0 : index
    %62 = vector.load %arg17[%c0_37, %c0_38] : memref<64x128xbf16, #tpu.memory_space<vmem>>, vector<64x128xbf16>
    %cst_39 = arith.constant dense<0.000000e+00> : vector<16x128xf32>
    %63 = tpu.matmul %61, %62, %cst_39 {dimension_numbers = #tpu.dot_dimension_numbers<[1], [0], [0], [1], [0, 0, 1, 1], [], []>} : vector<16x64xbf16>, vector<64x128xbf16>, vector<16x128xf32> -> vector<16x128xf32>
    %c0_40 = arith.constant 0 : index
    %c0_41 = arith.constant 0 : index
    %64 = vector.load %arg18[%c0_40, %c0_41] : memref<1x128xf32, #tpu.memory_space<vmem>>, vector<1x128xf32>
    %65 = vector.broadcast %64 : vector<1x128xf32> to vector<16x128xf32>
    %66 = arith.addf %63, %65 : vector<16x128xf32>
    %67 = vector.shape_cast %66 : vector<16x128xf32> to vector<2x8x128xf32>
    %68 = vector.shape_cast %28 : vector<2x128xf32> to vector<2x1x128xf32>
    "tpu.trace_start"() <{level = 10 : i32, message = "bqd,bkd->bqk"}> : () -> ()
    %cst_42 = arith.constant dense<0.000000e+00> : vector<2x1x8xf32>
    %69 = tpu.matmul %68, %67, %cst_42 {dimension_numbers = #tpu.dot_dimension_numbers<[2], [2], [1], [1], [0, 0, 0, 1, 1, 1], [0], [0]>} : vector<2x1x128xf32>, vector<2x8x128xf32>, vector<2x1x8xf32> -> vector<2x1x8xf32>
    "tpu.trace_stop"() : () -> ()
    %70 = vector.shape_cast %69 : vector<2x1x8xf32> to vector<2x8xf32>
    %cst_43 = arith.constant 0.0883883461 : f32
    %71 = vector.broadcast %cst_43 : f32 to vector<2x8xf32>
    %72 = arith.mulf %70, %71 : vector<2x8xf32>
    %cst_44 = arith.constant dense<0xFF800000> : vector<2xf32>
    %73 = vector.multi_reduction <maximumf>, %72, %cst_44 [1] : vector<2x8xf32> to vector<2xf32>
    %74 = vector.shape_cast %73 : vector<2xf32> to vector<2x1xf32>
    %75 = vector.broadcast %74 : vector<2x1xf32> to vector<2x8xf32>
    %76 = arith.subf %72, %75 : vector<2x8xf32>
    %77 = math.exp %76 : vector<2x8xf32>
    %cst_45 = arith.constant dense<0.000000e+00> : vector<2xf32>
    %78 = vector.multi_reduction <add>, %77, %cst_45 [1] : vector<2x8xf32> to vector<2xf32>
    %79 = vector.shape_cast %78 : vector<2xf32> to vector<2x1xf32>
    %80 = vector.broadcast %79 : vector<2x1xf32> to vector<2x8xf32>
    %81 = arith.divf %77, %80 : vector<2x8xf32>
    %c0_46 = arith.constant 0 : index
    %c0_47 = arith.constant 0 : index
    %82 = vector.load %arg4[%c0_46, %c0_47] : memref<2x4xf32, #tpu.memory_space<vmem>>, vector<2x4xf32>
    %c0_48 = arith.constant 0 : index
    %c0_49 = arith.constant 0 : index
    %83 = vector.load %arg5[%c0_48, %c0_49] : memref<2x4xf32, #tpu.memory_space<vmem>>, vector<2x4xf32>
    %84 = vector.shape_cast %29 : vector<2x8xf32> to vector<2x8x1xf32>
    %85 = vector.shape_cast %82 : vector<2x4xf32> to vector<2x1x4xf32>
    %86 = vector.broadcast %84 : vector<2x8x1xf32> to vector<2x8x4xf32>
    %87 = vector.broadcast %85 : vector<2x1x4xf32> to vector<2x8x4xf32>
    %88 = arith.subf %86, %87 : vector<2x8x4xf32>
    %89 = vector.shape_cast %30 : vector<2x8xf32> to vector<2x8x1xf32>
    %90 = vector.shape_cast %83 : vector<2x4xf32> to vector<2x1x4xf32>
    %91 = vector.broadcast %89 : vector<2x8x1xf32> to vector<2x8x4xf32>
    %92 = vector.broadcast %90 : vector<2x1x4xf32> to vector<2x8x4xf32>
    %93 = arith.subf %91, %92 : vector<2x8x4xf32>
    %94 = arith.mulf %88, %88 : vector<2x8x4xf32>
    %95 = arith.mulf %93, %93 : vector<2x8x4xf32>
    %96 = arith.addf %94, %95 : vector<2x8x4xf32>
    %cst_50 = arith.constant -0.055555556 : f32
    %97 = vector.broadcast %cst_50 : f32 to vector<2x8x4xf32>
    %98 = arith.mulf %96, %97 : vector<2x8x4xf32>
    %99 = math.exp %98 : vector<2x8x4xf32>
    %100 = arith.addf %82, %83 : vector<2x4xf32>
    %cst_51 = arith.constant 0.000000e+00 : f32
    %101 = vector.broadcast %cst_51 : f32 to vector<2x4xf32>
    %102 = arith.cmpf one, %100, %101 : vector<2x4xf32>
    %103 = arith.extui %102 : vector<2x4xi1> to vector<2x4xi32>
    %104 = arith.sitofp %103 : vector<2x4xi32> to vector<2x4xf32>
    %105 = vector.shape_cast %104 : vector<2x4xf32> to vector<2x1x4xf32>
    %106 = vector.broadcast %105 : vector<2x1x4xf32> to vector<2x8x4xf32>
    %107 = arith.mulf %99, %106 : vector<2x8x4xf32>
    %cst_52 = arith.constant dense<0.000000e+00> : vector<2x8xf32>
    %108 = vector.multi_reduction <add>, %107, %cst_52 [2] : vector<2x8x4xf32> to vector<2x8xf32>
    %109 = vector.shape_cast %108 : vector<2x8xf32> to vector<2x8x1xf32>
    %110 = vector.shape_cast %108 : vector<2x8xf32> to vector<2x1x8xf32>
    %111 = vector.broadcast %109 : vector<2x8x1xf32> to vector<2x8x8xf32>
    %112 = vector.broadcast %110 : vector<2x1x8xf32> to vector<2x8x8xf32>
    %113 = arith.subf %111, %112 : vector<2x8x8xf32>
    %cst_53 = arith.constant 0.000000e+00 : f32
    %114 = vector.broadcast %cst_53 : f32 to vector<2x8x8xf32>
    %115 = arith.cmpf ogt, %113, %114 : vector<2x8x8xf32>
    %cst_54 = arith.constant 0.000000e+00 : f32
    %116 = vector.broadcast %cst_54 : f32 to vector<2x8x8xf32>
    %117 = arith.cmpf olt, %113, %116 : vector<2x8x8xf32>
    %cst_55 = arith.constant -1.000000e+00 : f32
    %cst_56 = arith.constant 0.000000e+00 : f32
    %118 = vector.broadcast %cst_55 : f32 to vector<2x8x8xf32>
    %119 = vector.broadcast %cst_56 : f32 to vector<2x8x8xf32>
    %120 = arith.select %117, %118, %119 : vector<2x8x8xi1>, vector<2x8x8xf32>
    %cst_57 = arith.constant 1.000000e+00 : f32
    %121 = vector.broadcast %cst_57 : f32 to vector<2x8x8xf32>
    %122 = arith.select %115, %121, %120 : vector<2x8x8xi1>, vector<2x8x8xf32>
    %123 = vector.shape_cast %81 : vector<2x8xf32> to vector<2x8x1xf32>
    %124 = vector.shape_cast %81 : vector<2x8xf32> to vector<2x1x8xf32>
    %125 = vector.broadcast %123 : vector<2x8x1xf32> to vector<2x8x8xf32>
    %126 = vector.broadcast %124 : vector<2x1x8xf32> to vector<2x8x8xf32>
    %127 = arith.subf %125, %126 : vector<2x8x8xf32>
    %cst_58 = arith.constant 0.000000e+00 : f32
    %128 = vector.broadcast %cst_58 : f32 to vector<2x8x8xf32>
    %129 = arith.subf %128, %122 : vector<2x8x8xf32>
    %130 = arith.mulf %129, %127 : vector<2x8x8xf32>
    %cst_59 = arith.constant 1.000000e-01 : f32
    %131 = vector.broadcast %cst_59 : f32 to vector<2x8x8xf32>
    %132 = arith.addf %130, %131 : vector<2x8x8xf32>
    %cst_60 = arith.constant 0.000000e+00 : f32
    %133 = vector.broadcast %cst_60 : f32 to vector<2x8x8xf32>
    %134 = arith.maximumf %133, %132 : vector<2x8x8xf32>
    %135 = vector.shape_cast %134 : vector<2x8x8xf32> to vector<1x2x8x8xf32>
    %cst_61 = arith.constant dense<0.000000e+00> : vector<1xf32>
    %136 = vector.multi_reduction <add>, %135, %cst_61 [1, 2, 3] : vector<1x2x8x8xf32> to vector<1xf32>
    %137 = vector.shape_cast %136 : vector<1xf32> to vector<1x1x1x1xf32>
    %138 = vector.extract %137[0, 0, 0, 0] : f32 from vector<1x1x1x1xf32>
    %cst_62 = arith.constant 1.280000e+02 : f32
    %139 = arith.divf %138, %cst_62 : f32
    %cst_63 = arith.constant 9.99999993E-9 : f32
    %140 = vector.broadcast %cst_63 : f32 to vector<2x8xf32>
    %141 = arith.addf %81, %140 : vector<2x8xf32>
    %142 = math.log %141 : vector<2x8xf32>
    %143 = arith.mulf %81, %142 : vector<2x8xf32>
    %cst_64 = arith.constant dense<0.000000e+00> : vector<2xf32>
    %144 = vector.multi_reduction <add>, %143, %cst_64 [1] : vector<2x8xf32> to vector<2xf32>
    %145 = vector.shape_cast %144 : vector<2xf32> to vector<2x1xf32>
    %146 = vector.shape_cast %145 : vector<2x1xf32> to vector<1x2x1xf32>
    %cst_65 = arith.constant dense<0.000000e+00> : vector<1xf32>
    %147 = vector.multi_reduction <add>, %146, %cst_65 [1, 2] : vector<1x2x1xf32> to vector<1xf32>
    %148 = vector.shape_cast %147 : vector<1xf32> to vector<1x1x1xf32>
    %149 = vector.extract %148[0, 0, 0] : f32 from vector<1x1x1xf32>
    %cst_66 = arith.constant 2.000000e+00 : f32
    %150 = arith.divf %149, %cst_66 : f32
    %c0_67 = arith.constant 0 : index
    %c0_68 = arith.constant 0 : index
    %151 = vector.load %arg19[%c0_67, %c0_68] : memref<2x8xf32, #tpu.memory_space<vmem>>, vector<2x8xf32>
    tpu.vector_store %arg19[%c0_67, %c0_68], %81 {strides = array<i32>} : memref<2x8xf32, #tpu.memory_space<vmem>>, vector<2x8xf32>,
    %c0_69 = arith.constant 0 : index
    %c0_70 = arith.constant 0 : index
    %152 = memref.load %arg20[%c0_69, %c0_70] : memref<1x1xf32, #tpu.memory_space<smem>>
    memref.store %150, %arg20[%c0_69, %c0_70] : memref<1x1xf32, #tpu.memory_space<smem>>
    %c0_71 = arith.constant 0 : index
    %c0_72 = arith.constant 0 : index
    %153 = memref.load %arg21[%c0_71, %c0_72] : memref<1x1xf32, #tpu.memory_space<smem>>
    memref.store %139, %arg21[%c0_71, %c0_72] : memref<1x1xf32, #tpu.memory_space<smem>>
    return
  }
}

</mosaic_0001>

<llo_original>
// kernel: wp_attention_forward.1
$region0: #{wp_attention_forward.1}
  #allocation0 [shape = 'u32[]', space=smem, size = 0x4, offset = 0x4, fixed_abs, tag = 'smem constant byte address 0x4 - core index']
  #allocation1 [shape = 'u32[144,128]{1,0:T(1,128)}', space=vmem, size = 0x12000, scoped, tag = 'internal scratch']
  %s0 = inlined_call_operand.vmem [shape: f32[2,256], index: 0, kind: input, shape index: {}]
  %s1 = inlined_call_operand.vmem [shape: f32[2,8], index: 1, kind: input, shape index: {}]
  %s2 = inlined_call_operand.vmem [shape: f32[2,8], index: 2, kind: input, shape index: {}]
  %s3 = inlined_call_operand.vmem [shape: f32[2,8], index: 3, kind: input, shape index: {}]
  %s4 = inlined_call_operand.vmem [shape: f32[2,4], index: 4, kind: input, shape index: {}]
  %s5 = inlined_call_operand.vmem [shape: f32[2,4], index: 5, kind: input, shape index: {}]
  %s6 = inlined_call_operand.vmem [shape: bf16[256,512], index: 6, kind: input, shape index: {}]
  %s7 = inlined_call_operand.vmem [shape: bf16[8,512], index: 7, kind: input, shape index: {}]
  %s8 = inlined_call_operand.vmem [shape: f32[1,512], index: 8, kind: input, shape index: {}]
  %s9 = inlined_call_operand.vmem [shape: bf16[512,256], index: 9, kind: input, shape index: {}]
  %s10 = inlined_call_operand.vmem [shape: f32[1,256], index: 10, kind: input, shape index: {}]
  %s11 = inlined_call_operand.vmem [shape: bf16[256,128], index: 11, kind: input, shape index: {}]
  %s12 = inlined_call_operand.vmem [shape: f32[1,128], index: 12, kind: input, shape index: {}]
  %s13 = inlined_call_operand.vmem [shape: f32[2,128], index: 13, kind: input, shape index: {}]
  %s14 = inlined_call_operand.vmem [shape: f32[1,128], index: 14, kind: input, shape index: {}]
  %s15 = inlined_call_operand.vmem [shape: bf16[128,64], index: 15, kind: input, shape index: {}]
  %s16 = inlined_call_operand.vmem [shape: f32[1,64], index: 16, kind: input, shape index: {}]
  %s17 = inlined_call_operand.vmem [shape: bf16[64,128], index: 17, kind: input, shape index: {}]
  %s18 = inlined_call_operand.vmem [shape: f32[1,128], index: 18, kind: input, shape index: {}]
  %s19 = inlined_call_operand.hbm [shape: f32[2,8], index: 19, kind: output, shape index: {0}]
  %s20 = inlined_call_operand.hbm [shape: f32[1,1], index: 20, kind: output, shape index: {1}]
  %s21 = inlined_call_operand.hbm [shape: f32[1,1], index: 21, kind: output, shape index: {2}]
  %22 = xla_tuple %s19, %s20, %s21
  %s23 = sld [smem:[#allocation0]]
  $region102: #{wp_attention_forward.1} parent=0
    _
  %s25 = ssub.s32 1, %s23
  %s26 = scalar_select 0, %s25, %s23
  $region1: #{wp_attention_forward.1} parent=0
    #allocation2 [shape = 'u8[1024]{0}', space=vmem, size = 0x400, scoped, tag = 'output window, operand 0, single buffered']
    #allocation3 [shape = 's32[1]{0}', space=sflag, size = 0x4, scoped, tag = 'scoped memory for wp_attention_forward.1']
    #allocation4 [shape = 's32[1]{0}', space=sflag, size = 0x4, scoped, tag = 'scoped memory for wp_attention_forward.1']
    #allocation5 [shape = 'u8[512]{0}', space=smem, size = 0x200, scoped, tag = 'output window, operand 1, single buffered']
    #allocation6 [shape = 'u8[512]{0}', space=smem, size = 0x200, scoped, tag = 'output window, operand 2, single buffered']
    #allocation7 [shape = 's32[1]{0}', space=sflag, size = 0x4, scoped, tag = 'scoped memory for wp_attention_forward.1']
    %27 = vsyncpa [#allocation3], 0
    %28 = vsyncpa [#allocation4], 0
    %29 = vsyncpa [#allocation7], 0
    // Predicated region
    $region2: #{wp_attention_forward.1} parent=1 // pred_check
      _
    $region3: #{wp_attention_forward.1} parent=1 // pred_check_branch
      %31 = sbr.rel (0) target = $region5
    $region4: #{wp_attention_forward.1} parent=1 // pred_region
      _
    $region5: #{wp_attention_forward.1} parent=1 // pred_fallthru
      _
    // Predicated region
    $region6: #{wp_attention_forward.1} parent=1 // pred_check
      _
    $region7: #{wp_attention_forward.1} parent=1 // pred_check_branch
      %33 = sbr.rel (0) target = $region9
    $region8: #{wp_attention_forward.1} parent=1 // pred_region
      _
    $region9: #{wp_attention_forward.1} parent=1 // pred_fallthru
      _
    // Predicated region
    $region10: #{wp_attention_forward.1} parent=1 // pred_check
      _
    $region11: #{wp_attention_forward.1} parent=1 // pred_check_branch
      %35 = sbr.rel (0) target = $region13
    $region12: #{wp_attention_forward.1} parent=1 // pred_region
      _
    $region13: #{wp_attention_forward.1} parent=1 // pred_fallthru
      _
    // Predicated region
    $region14: #{wp_attention_forward.1} parent=1 // pred_check
      _
    $region15: #{wp_attention_forward.1} parent=1 // pred_check_branch
      %37 = sbr.rel (0) target = $region17
    $region16: #{wp_attention_forward.1} parent=1 // pred_region
      _
    $region17: #{wp_attention_forward.1} parent=1 // pred_fallthru
      _
    // Predicated region
    $region18: #{wp_attention_forward.1} parent=1 // pred_check
      _
    $region19: #{wp_attention_forward.1} parent=1 // pred_check_branch
      %39 = sbr.rel (0) target = $region21
    $region20: #{wp_attention_forward.1} parent=1 // pred_region
      _
    $region21: #{wp_attention_forward.1} parent=1 // pred_fallthru
      _
    // Predicated region
    $region22: #{wp_attention_forward.1} parent=1 // pred_check
      _
    $region23: #{wp_attention_forward.1} parent=1 // pred_check_branch
      %41 = sbr.rel (0) target = $region25
    $region24: #{wp_attention_forward.1} parent=1 // pred_region
      _
    $region25: #{wp_attention_forward.1} parent=1 // pred_fallthru
      _
    // Predicated region
    $region26: #{wp_attention_forward.1} parent=1 // pred_check
      _
    $region27: #{wp_attention_forward.1} parent=1 // pred_check_branch
      %43 = sbr.rel (0) target = $region29
    $region28: #{wp_attention_forward.1} parent=1 // pred_region
      _
    $region29: #{wp_attention_forward.1} parent=1 // pred_fallthru
      _
    // Predicated region
    $region30: #{wp_attention_forward.1} parent=1 // pred_check
      _
    $region31: #{wp_attention_forward.1} parent=1 // pred_check_branch
      %45 = sbr.rel (0) target = $region33
    $region32: #{wp_attention_forward.1} parent=1 // pred_region
      _
    $region33: #{wp_attention_forward.1} parent=1 // pred_fallthru
      _
    // Predicated region
    $region34: #{wp_attention_forward.1} parent=1 // pred_check
      _
    $region35: #{wp_attention_forward.1} parent=1 // pred_check_branch
      %47 = sbr.rel (0) target = $region37
    $region36: #{wp_attention_forward.1} parent=1 // pred_region
      _
    $region37: #{wp_attention_forward.1} parent=1 // pred_fallthru
      _
    // Predicated region
    $region38: #{wp_attention_forward.1} parent=1 // pred_check
      _
    $region39: #{wp_attention_forward.1} parent=1 // pred_check_branch
      %49 = sbr.rel (0) target = $region41
    $region40: #{wp_attention_forward.1} parent=1 // pred_region
      _
    $region41: #{wp_attention_forward.1} parent=1 // pred_fallthru
      _
    // Predicated region
    $region42: #{wp_attention_forward.1} parent=1 // pred_check
      _
    $region43: #{wp_attention_forward.1} parent=1 // pred_check_branch
      %51 = sbr.rel (0) target = $region45
    $region44: #{wp_attention_forward.1} parent=1 // pred_region
      _
    $region45: #{wp_attention_forward.1} parent=1 // pred_fallthru
      _
    // Predicated region
    $region46: #{wp_attention_forward.1} parent=1 // pred_check
      _
    $region47: #{wp_attention_forward.1} parent=1 // pred_check_branch
      %53 = sbr.rel (0) target = $region49
    $region48: #{wp_attention_forward.1} parent=1 // pred_region
      _
    $region49: #{wp_attention_forward.1} parent=1 // pred_fallthru
      _
    // Predicated region
    $region50: #{wp_attention_forward.1} parent=1 // pred_check
      _
    $region51: #{wp_attention_forward.1} parent=1 // pred_check_branch
      %55 = sbr.rel (0) target = $region53
    $region52: #{wp_attention_forward.1} parent=1 // pred_region
      _
    $region53: #{wp_attention_forward.1} parent=1 // pred_fallthru
      _
    // Predicated region
    $region54: #{wp_attention_forward.1} parent=1 // pred_check
      _
    $region55: #{wp_attention_forward.1} parent=1 // pred_check_branch
      %57 = sbr.rel (0) target = $region57
    $region56: #{wp_attention_forward.1} parent=1 // pred_region
      _
    $region57: #{wp_attention_forward.1} parent=1 // pred_fallthru
      _
    // Predicated region
    $region58: #{wp_attention_forward.1} parent=1 // pred_check
      _
    $region59: #{wp_attention_forward.1} parent=1 // pred_check_branch
      %59 = sbr.rel (0) target = $region61
    $region60: #{wp_attention_forward.1} parent=1 // pred_region
      _
    $region61: #{wp_attention_forward.1} parent=1 // pred_fallthru
      _
    // Predicated region
    $region62: #{wp_attention_forward.1} parent=1 // pred_check
      _
    $region63: #{wp_attention_forward.1} parent=1 // pred_check_branch
      %61 = sbr.rel (0) target = $region65
    $region64: #{wp_attention_forward.1} parent=1 // pred_region
      _
    $region65: #{wp_attention_forward.1} parent=1 // pred_fallthru
      _
    // Predicated region
    $region66: #{wp_attention_forward.1} parent=1 // pred_check
      _
    $region67: #{wp_attention_forward.1} parent=1 // pred_check_branch
      %63 = sbr.rel (0) target = $region69
    $region68: #{wp_attention_forward.1} parent=1 // pred_region
      _
    $region69: #{wp_attention_forward.1} parent=1 // pred_fallthru
      _
    // Predicated region
    $region70: #{wp_attention_forward.1} parent=1 // pred_check
      _
    $region71: #{wp_attention_forward.1} parent=1 // pred_check_branch
      %65 = sbr.rel (0) target = $region73
    $region72: #{wp_attention_forward.1} parent=1 // pred_region
      _
    $region73: #{wp_attention_forward.1} parent=1 // pred_fallthru
      _
    // Predicated region
    $region74: #{wp_attention_forward.1} parent=1 // pred_check
      _
    $region75: #{wp_attention_forward.1} parent=1 // pred_check_branch
      %67 = sbr.rel (0) target = $region77
    $region76: #{wp_attention_forward.1} parent=1 // pred_region
      _
    $region77: #{wp_attention_forward.1} parent=1 // pred_fallthru
      _
    %v69 = vld [vmem:[%s0] sm:$0xf]
    %v72 = vunpack.c.l.s4 1983009808
    %v73 = vunpack.c.0.s8 %v72
    %v74 = vlaneseq
    %v75 = vshrl.u32 %v74, 7
    %v76 = vsub.s32 %v73, %v75
    %v77 = vrot.slane %v69, %v76
    %v78 = vcombine.high %v77, %v77
    %v81 = vpack.c.bf16 %v77, %v77
    %v82 = vpack.c.bf16 %v78, %v78
    %v83 = vld [vmem:[%s6] sm:$0xff]
    %v84 = vld [vmem:[%s6 + $0x8] sm:$0xff]
    %v85 = vld [vmem:[%s6 + $0x10] sm:$0xff]
    %v86 = vld [vmem:[%s6 + $0x18] sm:$0xff]
    %v87 = vld [vmem:[%s6 + $0x20] sm:$0xff]
    %v88 = vld [vmem:[%s6 + $0x28] sm:$0xff]
    %v89 = vld [vmem:[%s6 + $0x30] sm:$0xff]
    %v90 = vld [vmem:[%s6 + $0x38] sm:$0xff]
    %v91 = vld [vmem:[%s6 + $0x40] sm:$0xff]
    %v92 = vld [vmem:[%s6 + $0x48] sm:$0xff]
    %v93 = vld [vmem:[%s6 + $0x50] sm:$0xff]
    %v94 = vld [vmem:[%s6 + $0x58] sm:$0xff]
    %v95 = vld [vmem:[%s6 + $0x60] sm:$0xff]
    %v96 = vld [vmem:[%s6 + $0x68] sm:$0xff]
    %v97 = vld [vmem:[%s6 + $0x70] sm:$0xff]
    %v98 = vld [vmem:[%s6 + $0x78] sm:$0xff]
    %v99 = vld [vmem:[%s6 + $0x80] sm:$0xff]
    %v100 = vld [vmem:[%s6 + $0x88] sm:$0xff]
    %v101 = vld [vmem:[%s6 + $0x90] sm:$0xff]
    %v102 = vld [vmem:[%s6 + $0x98] sm:$0xff]
    %v103 = vld [vmem:[%s6 + $0xa0] sm:$0xff]
    %v104 = vld [vmem:[%s6 + $0xa8] sm:$0xff]
    %v105 = vld [vmem:[%s6 + $0xb0] sm:$0xff]
    %v106 = vld [vmem:[%s6 + $0xb8] sm:$0xff]
    %v107 = vld [vmem:[%s6 + $0xc0] sm:$0xff]
    %v108 = vld [vmem:[%s6 + $0xc8] sm:$0xff]
    %v109 = vld [vmem:[%s6 + $0xd0] sm:$0xff]
    %v110 = vld [vmem:[%s6 + $0xd8] sm:$0xff]
    %v111 = vld [vmem:[%s6 + $0xe0] sm:$0xff]
    %v112 = vld [vmem:[%s6 + $0xe8] sm:$0xff]
    %v113 = vld [vmem:[%s6 + $0xf0] sm:$0xff]
    %v114 = vld [vmem:[%s6 + $0xf8] sm:$0xff]
    %v115 = vld [vmem:[%s6 + $0x100] sm:$0xff]
    %v116 = vld [vmem:[%s6 + $0x108] sm:$0xff]
    %v117 = vld [vmem:[%s6 + $0x110] sm:$0xff]
    %v118 = vld [vmem:[%s6 + $0x118] sm:$0xff]
    %v119 = vld [vmem:[%s6 + $0x120] sm:$0xff]
    %v120 = vld [vmem:[%s6 + $0x128] sm:$0xff]
    %v121 = vld [vmem:[%s6 + $0x130] sm:$0xff]
    %v122 = vld [vmem:[%s6 + $0x138] sm:$0xff]
    %v123 = vld [vmem:[%s6 + $0x140] sm:$0xff]
    %v124 = vld [vmem:[%s6 + $0x148] sm:$0xff]
    %v125 = vld [vmem:[%s6 + $0x150] sm:$0xff]
    %v126 = vld [vmem:[%s6 + $0x158] sm:$0xff]
    %v127 = vld [vmem:[%s6 + $0x160] sm:$0xff]
    %v128 = vld [vmem:[%s6 + $0x168] sm:$0xff]
    %v129 = vld [vmem:[%s6 + $0x170] sm:$0xff]
    %v130 = vld [vmem:[%s6 + $0x178] sm:$0xff]
    %v131 = vld [vmem:[%s6 + $0x180] sm:$0xff]
    %v132 = vld [vmem:[%s6 + $0x188] sm:$0xff]
    %v133 = vld [vmem:[%s6 + $0x190] sm:$0xff]
    %v134 = vld [vmem:[%s6 + $0x198] sm:$0xff]
    %v135 = vld [vmem:[%s6 + $0x1a0] sm:$0xff]
    %v136 = vld [vmem:[%s6 + $0x1a8] sm:$0xff]
    %v137 = vld [vmem:[%s6 + $0x1b0] sm:$0xff]
    %v138 = vld [vmem:[%s6 + $0x1b8] sm:$0xff]
    %v139 = vld [vmem:[%s6 + $0x1c0] sm:$0xff]
    %v140 = vld [vmem:[%s6 + $0x1c8] sm:$0xff]
    %v141 = vld [vmem:[%s6 + $0x1d0] sm:$0xff]
    %v142 = vld [vmem:[%s6 + $0x1d8] sm:$0xff]
    %v143 = vld [vmem:[%s6 + $0x1e0] sm:$0xff]
    %v144 = vld [vmem:[%s6 + $0x1e8] sm:$0xff]
    %v145 = vld [vmem:[%s6 + $0x1f0] sm:$0xff]
    %v146 = vld [vmem:[%s6 + $0x1f8] sm:$0xff]
    %v147 = vld [vmem:[%s1] sm:$0x3]
    %v148 = vpack.c.bf16 %v147, %v147
    %v149 = vld [vmem:[%s7] sm:$0xff]
    %v150 = vld [vmem:[%s7 + $0x8] sm:$0xff]
    %v153 = vunpack.c.l.b16 %v149
    %v154 = vunpack.c.h.b16 %v149
    %v155 = vunpack.c.l.b16 %v150
    %v156 = vunpack.c.h.b16 %v150
    %v157 = vpack.c.b16 %v153, %v153
    %v158 = vpack.c.b16 %v154, %v154
    %v159 = vpack.c.b16 %v155, %v155
    %v160 = vpack.c.b16 %v156, %v156
    %vm161 = vcmask 64512
    %v163 = vsel %vm161, %v148, 0
    %vm165 = vcmask 1043456
    %v167 = vsel %vm165, %v157, 0
    %v170 = vsel %vm165, %v158, 0
    %v173 = vsel %vm165, %v159, 0
    %v176 = vsel %vm165, %v160, 0
    %178 = vmatprep.subr.bf16.mxu0 %v170
    %179 = vmatpush1.bf16.msra.mxu0 %v167
    %180 = vmatprep.subr.bf16.mxu0 0
    %181 = vmatpush1.bf16.msra.mxu0 0
    %182 = vmatprep.subr.bf16.mxu0 0
    %183 = vmatpush1.bf16.msra.mxu0 0
    %184 = vmatprep.subr.bf16.mxu0 0
    %185 = vmatpush1.bf16.msra.mxu0 0
    %186 = vmatprep.subr.bf16.mxu0 0
    %187 = vmatpush1.bf16.msra.mxu0 0
    %188 = vmatprep.subr.bf16.mxu0 0
    %189 = vmatpush1.bf16.msra.mxu0 0
    %190 = vmatprep.subr.bf16.mxu0 0
    %191 = vmatpush1.bf16.msra.mxu0 0
    %192 = vmatprep.subr.bf16.mxu0 0
    %193 = vmatpush1.bf16.msra.mxu0 0
    %194 = vmatprep.subr.bf16.mxu0 0
    %195 = vmatpush1.bf16.msra.mxu0 0
    %196 = vmatprep.subr.bf16.mxu0 0
    %197 = vmatpush1.bf16.msra.mxu0 0
    %198 = vmatprep.subr.bf16.mxu0 0
    %199 = vmatpush1.bf16.msra.mxu0 0
    %200 = vmatprep.subr.bf16.mxu0 0
    %201 = vmatpush1.bf16.msra.mxu0 0
    %202 = vmatprep.subr.bf16.mxu0 0
    %203 = vmatpush1.bf16.msra.mxu0 0
    %204 = vmatprep.subr.bf16.mxu0 0
    %205 = vmatpush1.bf16.msra.mxu0 0
    %206 = vmatprep.subr.bf16.mxu0 0
    %207 = vmatpush1.bf16.msra.mxu0 0
    %208 = vmatprep.subr.bf16.mxu0 0
    %209 = vmatpush1.bf16.msra.mxu0 0
    %210 = vmatprep.mubr.bf16.mxu0 0
    %211 = vmatmul.mubr.bf16.gmra.mrb[0].mxu0 %v163
    %v212 = vpop.f32.mrb[0].mxu0
    %v213 = vadd.f32 0.0, %v212
    %v214 = vpop.f32.mrb[0].mxu0
    %v215 = vadd.f32 0.0, %v214
    %v216 = vpop.f32.mrb[0].mxu0
    %v217 = vpop.f32.mrb[0].mxu0
    %218 = vdwg.mxu0
    %219 = vmatprep.subr.bf16.mxu0 %v176
    %220 = vmatpush1.bf16.msra.mxu0 %v173
    %221 = vmatprep.subr.bf16.mxu0 0
    %222 = vmatpush1.bf16.msra.mxu0 0
    %223 = vmatprep.subr.bf16.mxu0 0
    %224 = vmatpush1.bf16.msra.mxu0 0
    %225 = vmatprep.subr.bf16.mxu0 0
    %226 = vmatpush1.bf16.msra.mxu0 0
    %227 = vmatprep.subr.bf16.mxu0 0
    %228 = vmatpush1.bf16.msra.mxu0 0
    %229 = vmatprep.subr.bf16.mxu0 0
    %230 = vmatpush1.bf16.msra.mxu0 0
    %231 = vmatprep.subr.bf16.mxu0 0
    %232 = vmatpush1.bf16.msra.mxu0 0
    %233 = vmatprep.subr.bf16.mxu0 0
    %234 = vmatpush1.bf16.msra.mxu0 0
    %235 = vmatprep.subr.bf16.mxu0 0
    %236 = vmatpush1.bf16.msra.mxu0 0
    %237 = vmatprep.subr.bf16.mxu0 0
    %238 = vmatpush1.bf16.msra.mxu0 0
    %239 = vmatprep.subr.bf16.mxu0 0
    %240 = vmatpush1.bf16.msra.mxu0 0
    %241 = vmatprep.subr.bf16.mxu0 0
    %242 = vmatpush1.bf16.msra.mxu0 0
    %243 = vmatprep.subr.bf16.mxu0 0
    %244 = vmatpush1.bf16.msra.mxu0 0
    %245 = vmatprep.subr.bf16.mxu0 0
    %246 = vmatpush1.bf16.msra.mxu0 0
    %247 = vmatprep.subr.bf16.mxu0 0
    %248 = vmatpush1.bf16.msra.mxu0 0
    %249 = vmatprep.subr.bf16.mxu0 0
    %250 = vmatpush1.bf16.msra.mxu0 0
    %251 = vmatprep.mubr.bf16.mxu0 0
    %252 = vmatmul.mubr.bf16.gmra.mrb[0].mxu0 %v163
    %v253 = vpop.f32.mrb[0].mxu0
    %v254 = vadd.f32 0.0, %v253
    %v255 = vpop.f32.mrb[0].mxu0
    %v256 = vadd.f32 0.0, %v255
    %v257 = vpop.f32.mrb[0].mxu0
    %v258 = vpop.f32.mrb[0].mxu0
    %259 = vdwg.mxu0
    %v324 = vunpack.c.l.b16 %v83
    %v325 = vunpack.c.h.b16 %v83
    %v326 = vunpack.c.l.b16 %v84
    %v327 = vunpack.c.h.b16 %v84
    %v328 = vunpack.c.l.b16 %v85
    %v329 = vunpack.c.h.b16 %v85
    %v330 = vunpack.c.l.b16 %v86
    %v331 = vunpack.c.h.b16 %v86
    %v332 = vunpack.c.l.b16 %v87
    %v333 = vunpack.c.h.b16 %v87
    %v334 = vunpack.c.l.b16 %v88
    %v335 = vunpack.c.h.b16 %v88
    %v336 = vunpack.c.l.b16 %v89
    %v337 = vunpack.c.h.b16 %v89
    %v338 = vunpack.c.l.b16 %v90
    %v339 = vunpack.c.h.b16 %v90
    %v340 = vunpack.c.l.b16 %v91
    %v341 = vunpack.c.h.b16 %v91
    %v342 = vunpack.c.l.b16 %v92
    %v343 = vunpack.c.h.b16 %v92
    %v344 = vunpack.c.l.b16 %v93
    %v345 = vunpack.c.h.b16 %v93
    %v346 = vunpack.c.l.b16 %v94
    %v347 = vunpack.c.h.b16 %v94
    %v348 = vunpack.c.l.b16 %v95
    %v349 = vunpack.c.h.b16 %v95
    %v350 = vunpack.c.l.b16 %v96
    %v351 = vunpack.c.h.b16 %v96
    %v352 = vunpack.c.l.b16 %v97
    %v353 = vunpack.c.h.b16 %v97
    %v354 = vunpack.c.l.b16 %v98
    %v355 = vunpack.c.h.b16 %v98
    %v356 = vunpack.c.l.b16 %v99
    %v357 = vunpack.c.h.b16 %v99
    %v358 = vunpack.c.l.b16 %v100
    %v359 = vunpack.c.h.b16 %v100
    %v360 = vunpack.c.l.b16 %v101
    %v361 = vunpack.c.h.b16 %v101
    %v362 = vunpack.c.l.b16 %v102
    %v363 = vunpack.c.h.b16 %v102
    %v364 = vunpack.c.l.b16 %v103
    %v365 = vunpack.c.h.b16 %v103
    %v366 = vunpack.c.l.b16 %v104
    %v367 = vunpack.c.h.b16 %v104
    %v368 = vunpack.c.l.b16 %v105
    %v369 = vunpack.c.h.b16 %v105
    %v370 = vunpack.c.l.b16 %v106
    %v371 = vunpack.c.h.b16 %v106
    %v372 = vunpack.c.l.b16 %v107
    %v373 = vunpack.c.h.b16 %v107
    %v374 = vunpack.c.l.b16 %v108
    %v375 = vunpack.c.h.b16 %v108
    %v376 = vunpack.c.l.b16 %v109
    %v377 = vunpack.c.h.b16 %v109
    %v378 = vunpack.c.l.b16 %v110
    %v379 = vunpack.c.h.b16 %v110
    %v380 = vunpack.c.l.b16 %v111
    %v381 = vunpack.c.h.b16 %v111
    %v382 = vunpack.c.l.b16 %v112
    %v383 = vunpack.c.h.b16 %v112
    %v384 = vunpack.c.l.b16 %v113
    %v385 = vunpack.c.h.b16 %v113
    %v386 = vunpack.c.l.b16 %v114
    %v387 = vunpack.c.h.b16 %v114
    %v388 = vunpack.c.l.b16 %v115
    %v389 = vunpack.c.h.b16 %v115
    %v390 = vunpack.c.l.b16 %v116
    %v391 = vunpack.c.h.b16 %v116
    %v392 = vunpack.c.l.b16 %v117
    %v393 = vunpack.c.h.b16 %v117
    %v394 = vunpack.c.l.b16 %v118
    %v395 = vunpack.c.h.b16 %v118
    %v396 = vunpack.c.l.b16 %v119
    %v397 = vunpack.c.h.b16 %v119
    %v398 = vunpack.c.l.b16 %v120
    %v399 = vunpack.c.h.b16 %v120
    %v400 = vunpack.c.l.b16 %v121
    %v401 = vunpack.c.h.b16 %v121
    %v402 = vunpack.c.l.b16 %v122
    %v403 = vunpack.c.h.b16 %v122
    %v404 = vunpack.c.l.b16 %v123
    %v405 = vunpack.c.h.b16 %v123
    %v406 = vunpack.c.l.b16 %v124
    %v407 = vunpack.c.h.b16 %v124
    %v408 = vunpack.c.l.b16 %v125
    %v409 = vunpack.c.h.b16 %v125
    %v410 = vunpack.c.l.b16 %v126
    %v411 = vunpack.c.h.b16 %v126
    %v412 = vunpack.c.l.b16 %v127
    %v413 = vunpack.c.h.b16 %v127
    %v414 = vunpack.c.l.b16 %v128
    %v415 = vunpack.c.h.b16 %v128
    %v416 = vunpack.c.l.b16 %v129
    %v417 = vunpack.c.h.b16 %v129
    %v418 = vunpack.c.l.b16 %v130
    %v419 = vunpack.c.h.b16 %v130
    %v420 = vunpack.c.l.b16 %v131
    %v421 = vunpack.c.h.b16 %v131
    %v422 = vunpack.c.l.b16 %v132
    %v423 = vunpack.c.h.b16 %v132
    %v424 = vunpack.c.l.b16 %v133
    %v425 = vunpack.c.h.b16 %v133
    %v426 = vunpack.c.l.b16 %v134
    %v427 = vunpack.c.h.b16 %v134
    %v428 = vunpack.c.l.b16 %v135
    %v429 = vunpack.c.h.b16 %v135
    %v430 = vunpack.c.l.b16 %v136
    %v431 = vunpack.c.h.b16 %v136
    %v432 = vunpack.c.l.b16 %v137
    %v433 = vunpack.c.h.b16 %v137
    %v434 = vunpack.c.l.b16 %v138
    %v435 = vunpack.c.h.b16 %v138
    %v436 = vunpack.c.l.b16 %v139
    %v437 = vunpack.c.h.b16 %v139
    %v438 = vunpack.c.l.b16 %v140
    %v439 = vunpack.c.h.b16 %v140
    %v440 = vunpack.c.l.b16 %v141
    %v441 = vunpack.c.h.b16 %v141
    %v442 = vunpack.c.l.b16 %v142
    %v443 = vunpack.c.h.b16 %v142
    %v444 = vunpack.c.l.b16 %v143
    %v445 = vunpack.c.h.b16 %v143
    %v446 = vunpack.c.l.b16 %v144
    %v447 = vunpack.c.h.b16 %v144
    %v448 = vunpack.c.l.b16 %v145
    %v449 = vunpack.c.h.b16 %v145
    %v450 = vunpack.c.l.b16 %v146
    %v451 = vunpack.c.h.b16 %v146
    %v452 = vpack.c.b16 %v328, %v324
    %v453 = vpack.c.b16 %v329, %v325
    %v454 = vpack.c.b16 %v330, %v326
    %v455 = vpack.c.b16 %v331, %v327
    %v456 = vpack.c.b16 %v336, %v332
    %v457 = vpack.c.b16 %v337, %v333
    %v458 = vpack.c.b16 %v338, %v334
    %v459 = vpack.c.b16 %v339, %v335
    %v460 = vpack.c.b16 %v344, %v340
    %v461 = vpack.c.b16 %v345, %v341
    %v462 = vpack.c.b16 %v346, %v342
    %v463 = vpack.c.b16 %v347, %v343
    %v464 = vpack.c.b16 %v352, %v348
    %v465 = vpack.c.b16 %v353, %v349
    %v466 = vpack.c.b16 %v354, %v350
    %v467 = vpack.c.b16 %v355, %v351
    %v468 = vpack.c.b16 %v360, %v356
    %v469 = vpack.c.b16 %v361, %v357
    %v470 = vpack.c.b16 %v362, %v358
    %v471 = vpack.c.b16 %v363, %v359
    %v472 = vpack.c.b16 %v368, %v364
    %v473 = vpack.c.b16 %v369, %v365
    %v474 = vpack.c.b16 %v370, %v366
    %v475 = vpack.c.b16 %v371, %v367
    %v476 = vpack.c.b16 %v376, %v372
    %v477 = vpack.c.b16 %v377, %v373
    %v478 = vpack.c.b16 %v378, %v374
    %v479 = vpack.c.b16 %v379, %v375
    %v480 = vpack.c.b16 %v384, %v380
    %v481 = vpack.c.b16 %v385, %v381
    %v482 = vpack.c.b16 %v386, %v382
    %v483 = vpack.c.b16 %v387, %v383
    %v484 = vpack.c.b16 %v392, %v388
    %v485 = vpack.c.b16 %v393, %v389
    %v486 = vpack.c.b16 %v394, %v390
    %v487 = vpack.c.b16 %v395, %v391
    %v488 = vpack.c.b16 %v400, %v396
    %v489 = vpack.c.b16 %v401, %v397
    %v490 = vpack.c.b16 %v402, %v398
    %v491 = vpack.c.b16 %v403, %v399
    %v492 = vpack.c.b16 %v408, %v404
    %v493 = vpack.c.b16 %v409, %v405
    %v494 = vpack.c.b16 %v410, %v406
    %v495 = vpack.c.b16 %v411, %v407
    %v496 = vpack.c.b16 %v416, %v412
    %v497 = vpack.c.b16 %v417, %v413
    %v498 = vpack.c.b16 %v418, %v414
    %v499 = vpack.c.b16 %v419, %v415
    %v500 = vpack.c.b16 %v424, %v420
    %v501 = vpack.c.b16 %v425, %v421
    %v502 = vpack.c.b16 %v426, %v422
    %v503 = vpack.c.b16 %v427, %v423
    %v504 = vpack.c.b16 %v432, %v428
    %v505 = vpack.c.b16 %v433, %v429
    %v506 = vpack.c.b16 %v434, %v430
    %v507 = vpack.c.b16 %v435, %v431
    %v508 = vpack.c.b16 %v440, %v436
    %v509 = vpack.c.b16 %v441, %v437
    %v510 = vpack.c.b16 %v442, %v438
    %v511 = vpack.c.b16 %v443, %v439
    %v512 = vpack.c.b16 %v448, %v444
    %v513 = vpack.c.b16 %v449, %v445
    %v514 = vpack.c.b16 %v450, %v446
    %v515 = vpack.c.b16 %v451, %v447
    %580 = vmatprep.subr.bf16.mxu0 %v453
    %581 = vmatpush1.bf16.msra.mxu0 %v452
    %582 = vmatprep.subr.bf16.mxu0 %v457
    %583 = vmatpush1.bf16.msra.mxu0 %v456
    %584 = vmatprep.subr.bf16.mxu0 %v461
    %585 = vmatpush1.bf16.msra.mxu0 %v460
    %586 = vmatprep.subr.bf16.mxu0 %v465
    %587 = vmatpush1.bf16.msra.mxu0 %v464
    %588 = vmatprep.subr.bf16.mxu0 %v469
    %589 = vmatpush1.bf16.msra.mxu0 %v468
    %590 = vmatprep.subr.bf16.mxu0 %v473
    %591 = vmatpush1.bf16.msra.mxu0 %v472
    %592 = vmatprep.subr.bf16.mxu0 %v477
    %593 = vmatpush1.bf16.msra.mxu0 %v476
    %594 = vmatprep.subr.bf16.mxu0 %v481
    %595 = vmatpush1.bf16.msra.mxu0 %v480
    %596 = vmatprep.subr.bf16.mxu0 %v485
    %597 = vmatpush1.bf16.msra.mxu0 %v484
    %598 = vmatprep.subr.bf16.mxu0 %v489
    %599 = vmatpush1.bf16.msra.mxu0 %v488
    %600 = vmatprep.subr.bf16.mxu0 %v493
    %601 = vmatpush1.bf16.msra.mxu0 %v492
    %602 = vmatprep.subr.bf16.mxu0 %v497
    %603 = vmatpush1.bf16.msra.mxu0 %v496
    %604 = vmatprep.subr.bf16.mxu0 %v501
    %605 = vmatpush1.bf16.msra.mxu0 %v500
    %606 = vmatprep.subr.bf16.mxu0 %v505
    %607 = vmatpush1.bf16.msra.mxu0 %v504
    %608 = vmatprep.subr.bf16.mxu0 %v509
    %609 = vmatpush1.bf16.msra.mxu0 %v508
    %610 = vmatprep.subr.bf16.mxu0 %v513
    %611 = vmatpush1.bf16.msra.mxu0 %v512
    %612 = vmatprep.mubr.bf16.mxu0 %v82
    %613 = vmatmul.mubr.bf16.gmra.mrb[0].mxu0 %v81
    %v614 = vpop.f32.mrb[0].mxu0
    %v615 = vadd.f32 %v213, %v614
    %v616 = vpop.f32.mrb[0].mxu0
    %v617 = vadd.f32 %v215, %v616
    %v618 = vpop.f32.mrb[0].mxu0
    %v619 = vpop.f32.mrb[0].mxu0
    %620 = vdwg.mxu0
    %621 = vmatprep.subr.bf16.mxu0 %v455
    %622 = vmatpush1.bf16.msra.mxu0 %v454
    %623 = vmatprep.subr.bf16.mxu0 %v459
    %624 = vmatpush1.bf16.msra.mxu0 %v458
    %625 = vmatprep.subr.bf16.mxu0 %v463
    %626 = vmatpush1.bf16.msra.mxu0 %v462
    %627 = vmatprep.subr.bf16.mxu0 %v467
    %628 = vmatpush1.bf16.msra.mxu0 %v466
    %629 = vmatprep.subr.bf16.mxu0 %v471
    %630 = vmatpush1.bf16.msra.mxu0 %v470
    %631 = vmatprep.subr.bf16.mxu0 %v475
    %632 = vmatpush1.bf16.msra.mxu0 %v474
    %633 = vmatprep.subr.bf16.mxu0 %v479
    %634 = vmatpush1.bf16.msra.mxu0 %v478
    %635 = vmatprep.subr.bf16.mxu0 %v483
    %636 = vmatpush1.bf16.msra.mxu0 %v482
    %637 = vmatprep.subr.bf16.mxu0 %v487
    %638 = vmatpush1.bf16.msra.mxu0 %v486
    %639 = vmatprep.subr.bf16.mxu0 %v491
    %640 = vmatpush1.bf16.msra.mxu0 %v490
    %641 = vmatprep.subr.bf16.mxu0 %v495
    %642 = vmatpush1.bf16.msra.mxu0 %v494
    %643 = vmatprep.subr.bf16.mxu0 %v499
    %644 = vmatpush1.bf16.msra.mxu0 %v498
    %645 = vmatprep.subr.bf16.mxu0 %v503
    %646 = vmatpush1.bf16.msra.mxu0 %v502
    %647 = vmatprep.subr.bf16.mxu0 %v507
    %648 = vmatpush1.bf16.msra.mxu0 %v506
    %649 = vmatprep.subr.bf16.mxu0 %v511
    %650 = vmatpush1.bf16.msra.mxu0 %v510
    %651 = vmatprep.subr.bf16.mxu0 %v515
    %652 = vmatpush1.bf16.msra.mxu0 %v514
    %653 = vmatprep.mubr.bf16.mxu0 %v82
    %654 = vmatmul.mubr.bf16.gmra.mrb[0].mxu0 %v81
    %v655 = vpop.f32.mrb[0].mxu0
    %v656 = vadd.f32 %v254, %v655
    %v657 = vpop.f32.mrb[0].mxu0
    %v658 = vadd.f32 %v256, %v657
    %v659 = vpop.f32.mrb[0].mxu0
    %v660 = vpop.f32.mrb[0].mxu0
    %661 = vdwg.mxu0
    %v662 = vld [vmem:[%s8] sm:$0xf]
    %v664 = vlaneseq
    %v665 = vshrl.u32 %v664, 7
    %v666 = vsub.s32 0, %v665
    %v667 = vrot.slane %v662, %v666
    %v668 = vlaneseq
    %v669 = vshrl.u32 %v668, 7
    %v670 = vsub.s32 1, %v669
    %v671 = vrot.slane %v662, %v670
    %v672 = vlaneseq
    %v673 = vshrl.u32 %v672, 7
    %v674 = vsub.s32 2, %v673
    %v675 = vrot.slane %v662, %v674
    %v676 = vlaneseq
    %v677 = vshrl.u32 %v676, 7
    %v678 = vsub.s32 3, %v677
    %v679 = vrot.slane %v662, %v678
    %v684 = vadd.f32 %v615, %v667
    %v685 = vadd.f32 %v617, %v671
    %v686 = vadd.f32 %v656, %v675
    %v687 = vadd.f32 %v658, %v679
    %vm688 = vcmp.gt.f32.partialorder %v684, 0.0
    %vm689 = vcmp.gt.f32.partialorder %v685, 0.0
    %vm690 = vcmp.gt.f32.partialorder %v686, 0.0
    %vm691 = vcmp.gt.f32.partialorder %v687, 0.0
    %v692 = vmul.f32 %v684, 0.01
    %v693 = vmul.f32 %v685, 0.01
    %v694 = vmul.f32 %v686, 0.01
    %v695 = vmul.f32 %v687, 0.01
    %v696 = vsel %vm688, %v684, %v692
    %v697 = vsel %vm689, %v685, %v693
    %v698 = vsel %vm690, %v686, %v694
    %v699 = vsel %vm691, %v687, %v695
    %v700 = vpack.c.bf16 %v696, %v696
    %v701 = vpack.c.bf16 %v697, %v697
    %v702 = vpack.c.bf16 %v698, %v698
    %v703 = vpack.c.bf16 %v699, %v699
    %v704 = vld [vmem:[%s9] sm:$0xff]
    %v705 = vld [vmem:[%s9 + $0x8] sm:$0xff]
    %v706 = vld [vmem:[%s9 + $0x10] sm:$0xff]
    %v707 = vld [vmem:[%s9 + $0x18] sm:$0xff]
    %v708 = vld [vmem:[%s9 + $0x20] sm:$0xff]
    %v709 = vld [vmem:[%s9 + $0x28] sm:$0xff]
    %v710 = vld [vmem:[%s9 + $0x30] sm:$0xff]
    %v711 = vld [vmem:[%s9 + $0x38] sm:$0xff]
    %v712 = vld [vmem:[%s9 + $0x40] sm:$0xff]
    %v713 = vld [vmem:[%s9 + $0x48] sm:$0xff]
    %v714 = vld [vmem:[%s9 + $0x50] sm:$0xff]
    %v715 = vld [vmem:[%s9 + $0x58] sm:$0xff]
    %v716 = vld [vmem:[%s9 + $0x60] sm:$0xff]
    %v717 = vld [vmem:[%s9 + $0x68] sm:$0xff]
    %v718 = vld [vmem:[%s9 + $0x70] sm:$0xff]
    %v719 = vld [vmem:[%s9 + $0x78] sm:$0xff]
    %v720 = vld [vmem:[%s9 + $0x80] sm:$0xff]
    %v721 = vld [vmem:[%s9 + $0x88] sm:$0xff]
    %v722 = vld [vmem:[%s9 + $0x90] sm:$0xff]
    %v723 = vld [vmem:[%s9 + $0x98] sm:$0xff]
    %v724 = vld [vmem:[%s9 + $0xa0] sm:$0xff]
    %v725 = vld [vmem:[%s9 + $0xa8] sm:$0xff]
    %v726 = vld [vmem:[%s9 + $0xb0] sm:$0xff]
    %v727 = vld [vmem:[%s9 + $0xb8] sm:$0xff]
    %v728 = vld [vmem:[%s9 + $0xc0] sm:$0xff]
    %v729 = vld [vmem:[%s9 + $0xc8] sm:$0xff]
    %v730 = vld [vmem:[%s9 + $0xd0] sm:$0xff]
    %v731 = vld [vmem:[%s9 + $0xd8] sm:$0xff]
    %v732 = vld [vmem:[%s9 + $0xe0] sm:$0xff]
    %v733 = vld [vmem:[%s9 + $0xe8] sm:$0xff]
    %v734 = vld [vmem:[%s9 + $0xf0] sm:$0xff]
    %v735 = vld [vmem:[%s9 + $0xf8] sm:$0xff]
    %v736 = vld [vmem:[%s9 + $0x100] sm:$0xff]
    %v737 = vld [vmem:[%s9 + $0x108] sm:$0xff]
    %v738 = vld [vmem:[%s9 + $0x110] sm:$0xff]
    %v739 = vld [vmem:[%s9 + $0x118] sm:$0xff]
    %v740 = vld [vmem:[%s9 + $0x120] sm:$0xff]
    %v741 = vld [vmem:[%s9 + $0x128] sm:$0xff]
    %v742 = vld [vmem:[%s9 + $0x130] sm:$0xff]
    %v743 = vld [vmem:[%s9 + $0x138] sm:$0xff]
    %v744 = vld [vmem:[%s9 + $0x140] sm:$0xff]
    %v745 = vld [vmem:[%s9 + $0x148] sm:$0xff]
    %v746 = vld [vmem:[%s9 + $0x150] sm:$0xff]
    %v747 = vld [vmem:[%s9 + $0x158] sm:$0xff]
    %v748 = vld [vmem:[%s9 + $0x160] sm:$0xff]
    %v749 = vld [vmem:[%s9 + $0x168] sm:$0xff]
    %v750 = vld [vmem:[%s9 + $0x170] sm:$0xff]
    %v751 = vld [vmem:[%s9 + $0x178] sm:$0xff]
    %v752 = vld [vmem:[%s9 + $0x180] sm:$0xff]
    %v753 = vld [vmem:[%s9 + $0x188] sm:$0xff]
    %v754 = vld [vmem:[%s9 + $0x190] sm:$0xff]
    %v755 = vld [vmem:[%s9 + $0x198] sm:$0xff]
    %v756 = vld [vmem:[%s9 + $0x1a0] sm:$0xff]
    %v757 = vld [vmem:[%s9 + $0x1a8] sm:$0xff]
    %v758 = vld [vmem:[%s9 + $0x1b0] sm:$0xff]
    %v759 = vld [vmem:[%s9 + $0x1b8] sm:$0xff]
    %v760 = vld [vmem:[%s9 + $0x1c0] sm:$0xff]
    %v761 = vld [vmem:[%s9 + $0x1c8] sm:$0xff]
    %v762 = vld [vmem:[%s9 + $0x1d0] sm:$0xff]
    %v763 = vld [vmem:[%s9 + $0x1d8] sm:$0xff]
    %v764 = vld [vmem:[%s9 + $0x1e0] sm:$0xff]
    %v765 = vld [vmem:[%s9 + $0x1e8] sm:$0xff]
    %v766 = vld [vmem:[%s9 + $0x1f0] sm:$0xff]
    %v767 = vld [vmem:[%s9 + $0x1f8] sm:$0xff]
    %v768 = vld [vmem:[%s10] sm:$0x3]
    %v770 = vlaneseq
    %v771 = vshrl.u32 %v770, 7
    %v772 = vsub.s32 0, %v771
    %v773 = vrot.slane %v768, %v772
    %v774 = vlaneseq
    %v775 = vshrl.u32 %v774, 7
    %v776 = vsub.s32 1, %v775
    %v777 = vrot.slane %v768, %v776
    %v844 = vunpack.c.l.b16 %v704
    %v845 = vunpack.c.h.b16 %v704
    %v846 = vunpack.c.l.b16 %v705
    %v847 = vunpack.c.h.b16 %v705
    %v848 = vunpack.c.l.b16 %v706
    %v849 = vunpack.c.h.b16 %v706
    %v850 = vunpack.c.l.b16 %v707
    %v851 = vunpack.c.h.b16 %v707
    %v852 = vunpack.c.l.b16 %v708
    %v853 = vunpack.c.h.b16 %v708
    %v854 = vunpack.c.l.b16 %v709
    %v855 = vunpack.c.h.b16 %v709
    %v856 = vunpack.c.l.b16 %v710
    %v857 = vunpack.c.h.b16 %v710
    %v858 = vunpack.c.l.b16 %v711
    %v859 = vunpack.c.h.b16 %v711
    %v860 = vunpack.c.l.b16 %v712
    %v861 = vunpack.c.h.b16 %v712
    %v862 = vunpack.c.l.b16 %v713
    %v863 = vunpack.c.h.b16 %v713
    %v864 = vunpack.c.l.b16 %v714
    %v865 = vunpack.c.h.b16 %v714
    %v866 = vunpack.c.l.b16 %v715
    %v867 = vunpack.c.h.b16 %v715
    %v868 = vunpack.c.l.b16 %v716
    %v869 = vunpack.c.h.b16 %v716
    %v870 = vunpack.c.l.b16 %v717
    %v871 = vunpack.c.h.b16 %v717
    %v872 = vunpack.c.l.b16 %v718
    %v873 = vunpack.c.h.b16 %v718
    %v874 = vunpack.c.l.b16 %v719
    %v875 = vunpack.c.h.b16 %v719
    %v876 = vunpack.c.l.b16 %v720
    %v877 = vunpack.c.h.b16 %v720
    %v878 = vunpack.c.l.b16 %v721
    %v879 = vunpack.c.h.b16 %v721
    %v880 = vunpack.c.l.b16 %v722
    %v881 = vunpack.c.h.b16 %v722
    %v882 = vunpack.c.l.b16 %v723
    %v883 = vunpack.c.h.b16 %v723
    %v884 = vunpack.c.l.b16 %v724
    %v885 = vunpack.c.h.b16 %v724
    %v886 = vunpack.c.l.b16 %v725
    %v887 = vunpack.c.h.b16 %v725
    %v888 = vunpack.c.l.b16 %v726
    %v889 = vunpack.c.h.b16 %v726
    %v890 = vunpack.c.l.b16 %v727
    %v891 = vunpack.c.h.b16 %v727
    %v892 = vunpack.c.l.b16 %v728
    %v893 = vunpack.c.h.b16 %v728
    %v894 = vunpack.c.l.b16 %v729
    %v895 = vunpack.c.h.b16 %v729
    %v896 = vunpack.c.l.b16 %v730
    %v897 = vunpack.c.h.b16 %v730
    %v898 = vunpack.c.l.b16 %v731
    %v899 = vunpack.c.h.b16 %v731
    %v900 = vunpack.c.l.b16 %v732
    %v901 = vunpack.c.h.b16 %v732
    %v902 = vunpack.c.l.b16 %v733
    %v903 = vunpack.c.h.b16 %v733
    %v904 = vunpack.c.l.b16 %v734
    %v905 = vunpack.c.h.b16 %v734
    %v906 = vunpack.c.l.b16 %v735
    %v907 = vunpack.c.h.b16 %v735
    %v908 = vunpack.c.l.b16 %v736
    %v909 = vunpack.c.h.b16 %v736
    %v910 = vunpack.c.l.b16 %v737
    %v911 = vunpack.c.h.b16 %v737
    %v912 = vunpack.c.l.b16 %v738
    %v913 = vunpack.c.h.b16 %v738
    %v914 = vunpack.c.l.b16 %v739
    %v915 = vunpack.c.h.b16 %v739
    %v916 = vunpack.c.l.b16 %v740
    %v917 = vunpack.c.h.b16 %v740
    %v918 = vunpack.c.l.b16 %v741
    %v919 = vunpack.c.h.b16 %v741
    %v920 = vunpack.c.l.b16 %v742
    %v921 = vunpack.c.h.b16 %v742
    %v922 = vunpack.c.l.b16 %v743
    %v923 = vunpack.c.h.b16 %v743
    %v924 = vunpack.c.l.b16 %v744
    %v925 = vunpack.c.h.b16 %v744
    %v926 = vunpack.c.l.b16 %v745
    %v927 = vunpack.c.h.b16 %v745
    %v928 = vunpack.c.l.b16 %v746
    %v929 = vunpack.c.h.b16 %v746
    %v930 = vunpack.c.l.b16 %v747
    %v931 = vunpack.c.h.b16 %v747
    %v932 = vunpack.c.l.b16 %v748
    %v933 = vunpack.c.h.b16 %v748
    %v934 = vunpack.c.l.b16 %v749
    %v935 = vunpack.c.h.b16 %v749
    %v936 = vunpack.c.l.b16 %v750
    %v937 = vunpack.c.h.b16 %v750
    %v938 = vunpack.c.l.b16 %v751
    %v939 = vunpack.c.h.b16 %v751
    %v940 = vunpack.c.l.b16 %v752
    %v941 = vunpack.c.h.b16 %v752
    %v942 = vunpack.c.l.b16 %v753
    %v943 = vunpack.c.h.b16 %v753
    %v944 = vunpack.c.l.b16 %v754
    %v945 = vunpack.c.h.b16 %v754
    %v946 = vunpack.c.l.b16 %v755
    %v947 = vunpack.c.h.b16 %v755
    %v948 = vunpack.c.l.b16 %v756
    %v949 = vunpack.c.h.b16 %v756
    %v950 = vunpack.c.l.b16 %v757
    %v951 = vunpack.c.h.b16 %v757
    %v952 = vunpack.c.l.b16 %v758
    %v953 = vunpack.c.h.b16 %v758
    %v954 = vunpack.c.l.b16 %v759
    %v955 = vunpack.c.h.b16 %v759
    %v956 = vunpack.c.l.b16 %v760
    %v957 = vunpack.c.h.b16 %v760
    %v958 = vunpack.c.l.b16 %v761
    %v959 = vunpack.c.h.b16 %v761
    %v960 = vunpack.c.l.b16 %v762
    %v961 = vunpack.c.h.b16 %v762
    %v962 = vunpack.c.l.b16 %v763
    %v963 = vunpack.c.h.b16 %v763
    %v964 = vunpack.c.l.b16 %v764
    %v965 = vunpack.c.h.b16 %v764
    %v966 = vunpack.c.l.b16 %v765
    %v967 = vunpack.c.h.b16 %v765
    %v968 = vunpack.c.l.b16 %v766
    %v969 = vunpack.c.h.b16 %v766
    %v970 = vunpack.c.l.b16 %v767
    %v971 = vunpack.c.h.b16 %v767
    %v972 = vpack.c.b16 %v846, %v844
    %v973 = vpack.c.b16 %v847, %v845
    %v974 = vpack.c.b16 %v850, %v848
    %v975 = vpack.c.b16 %v851, %v849
    %v976 = vpack.c.b16 %v854, %v852
    %v977 = vpack.c.b16 %v855, %v853
    %v978 = vpack.c.b16 %v858, %v856
    %v979 = vpack.c.b16 %v859, %v857
    %v980 = vpack.c.b16 %v862, %v860
    %v981 = vpack.c.b16 %v863, %v861
    %v982 = vpack.c.b16 %v866, %v864
    %v983 = vpack.c.b16 %v867, %v865
    %v984 = vpack.c.b16 %v870, %v868
    %v985 = vpack.c.b16 %v871, %v869
    %v986 = vpack.c.b16 %v874, %v872
    %v987 = vpack.c.b16 %v875, %v873
    %v988 = vpack.c.b16 %v878, %v876
    %v989 = vpack.c.b16 %v879, %v877
    %v990 = vpack.c.b16 %v882, %v880
    %v991 = vpack.c.b16 %v883, %v881
    %v992 = vpack.c.b16 %v886, %v884
    %v993 = vpack.c.b16 %v887, %v885
    %v994 = vpack.c.b16 %v890, %v888
    %v995 = vpack.c.b16 %v891, %v889
    %v996 = vpack.c.b16 %v894, %v892
    %v997 = vpack.c.b16 %v895, %v893
    %v998 = vpack.c.b16 %v898, %v896
    %v999 = vpack.c.b16 %v899, %v897
    %v1000 = vpack.c.b16 %v902, %v900
    %v1001 = vpack.c.b16 %v903, %v901
    %v1002 = vpack.c.b16 %v906, %v904
    %v1003 = vpack.c.b16 %v907, %v905
    %v1004 = vpack.c.b16 %v910, %v908
    %v1005 = vpack.c.b16 %v911, %v909
    %v1006 = vpack.c.b16 %v914, %v912
    %v1007 = vpack.c.b16 %v915, %v913
    %v1008 = vpack.c.b16 %v918, %v916
    %v1009 = vpack.c.b16 %v919, %v917
    %v1010 = vpack.c.b16 %v922, %v920
    %v1011 = vpack.c.b16 %v923, %v921
    %v1012 = vpack.c.b16 %v926, %v924
    %v1013 = vpack.c.b16 %v927, %v925
    %v1014 = vpack.c.b16 %v930, %v928
    %v1015 = vpack.c.b16 %v931, %v929
    %v1016 = vpack.c.b16 %v934, %v932
    %v1017 = vpack.c.b16 %v935, %v933
    %v1018 = vpack.c.b16 %v938, %v936
    %v1019 = vpack.c.b16 %v939, %v937
    %v1020 = vpack.c.b16 %v942, %v940
    %v1021 = vpack.c.b16 %v943, %v941
    %v1022 = vpack.c.b16 %v946, %v944
    %v1023 = vpack.c.b16 %v947, %v945
    %v1024 = vpack.c.b16 %v950, %v948
    %v1025 = vpack.c.b16 %v951, %v949
    %v1026 = vpack.c.b16 %v954, %v952
    %v1027 = vpack.c.b16 %v955, %v953
    %v1028 = vpack.c.b16 %v958, %v956
    %v1029 = vpack.c.b16 %v959, %v957
    %v1030 = vpack.c.b16 %v962, %v960
    %v1031 = vpack.c.b16 %v963, %v961
    %v1032 = vpack.c.b16 %v966, %v964
    %v1033 = vpack.c.b16 %v967, %v965
    %v1034 = vpack.c.b16 %v970, %v968
    %v1035 = vpack.c.b16 %v971, %v969
    %1100 = vmatprep.subr.bf16.mxu0 %v973
    %1101 = vmatpush1.bf16.msra.mxu0 %v972
    %1102 = vmatprep.subr.bf16.mxu0 %v975
    %1103 = vmatpush1.bf16.msra.mxu0 %v974
    %1104 = vmatprep.subr.bf16.mxu0 %v977
    %1105 = vmatpush1.bf16.msra.mxu0 %v976
    %1106 = vmatprep.subr.bf16.mxu0 %v979
    %1107 = vmatpush1.bf16.msra.mxu0 %v978
    %1108 = vmatprep.subr.bf16.mxu0 %v981
    %1109 = vmatpush1.bf16.msra.mxu0 %v980
    %1110 = vmatprep.subr.bf16.mxu0 %v983
    %1111 = vmatpush1.bf16.msra.mxu0 %v982
    %1112 = vmatprep.subr.bf16.mxu0 %v985
    %1113 = vmatpush1.bf16.msra.mxu0 %v984
    %1114 = vmatprep.subr.bf16.mxu0 %v987
    %1115 = vmatpush1.bf16.msra.mxu0 %v986
    %1116 = vmatprep.subr.bf16.mxu0 %v989
    %1117 = vmatpush1.bf16.msra.mxu0 %v988
    %1118 = vmatprep.subr.bf16.mxu0 %v991
    %1119 = vmatpush1.bf16.msra.mxu0 %v990
    %1120 = vmatprep.subr.bf16.mxu0 %v993
    %1121 = vmatpush1.bf16.msra.mxu0 %v992
    %1122 = vmatprep.subr.bf16.mxu0 %v995
    %1123 = vmatpush1.bf16.msra.mxu0 %v994
    %1124 = vmatprep.subr.bf16.mxu0 %v997
    %1125 = vmatpush1.bf16.msra.mxu0 %v996
    %1126 = vmatprep.subr.bf16.mxu0 %v999
    %1127 = vmatpush1.bf16.msra.mxu0 %v998
    %1128 = vmatprep.subr.bf16.mxu0 %v1001
    %1129 = vmatpush1.bf16.msra.mxu0 %v1000
    %1130 = vmatprep.subr.bf16.mxu0 %v1003
    %1131 = vmatpush1.bf16.msra.mxu0 %v1002
    %1132 = vmatprep.mubr.bf16.mxu0 %v701
    %1133 = vmatmul.mubr.bf16.gmra.mrb[0].mxu0 %v700
    %v1134 = vpop.f32.mrb[0].mxu0
    %v1135 = vadd.f32 %v773, %v1134
    %v1136 = vpop.f32.mrb[0].mxu0
    %v1137 = vadd.f32 %v777, %v1136
    %v1138 = vpop.f32.mrb[0].mxu0
    %v1139 = vpop.f32.mrb[0].mxu0
    %1140 = vdwg.mxu0
    %1141 = vmatprep.subr.bf16.mxu0 %v1005
    %1142 = vmatpush1.bf16.msra.mxu0 %v1004
    %1143 = vmatprep.subr.bf16.mxu0 %v1007
    %1144 = vmatpush1.bf16.msra.mxu0 %v1006
    %1145 = vmatprep.subr.bf16.mxu0 %v1009
    %1146 = vmatpush1.bf16.msra.mxu0 %v1008
    %1147 = vmatprep.subr.bf16.mxu0 %v1011
    %1148 = vmatpush1.bf16.msra.mxu0 %v1010
    %1149 = vmatprep.subr.bf16.mxu0 %v1013
    %1150 = vmatpush1.bf16.msra.mxu0 %v1012
    %1151 = vmatprep.subr.bf16.mxu0 %v1015
    %1152 = vmatpush1.bf16.msra.mxu0 %v1014
    %1153 = vmatprep.subr.bf16.mxu0 %v1017
    %1154 = vmatpush1.bf16.msra.mxu0 %v1016
    %1155 = vmatprep.subr.bf16.mxu0 %v1019
    %1156 = vmatpush1.bf16.msra.mxu0 %v1018
    %1157 = vmatprep.subr.bf16.mxu0 %v1021
    %1158 = vmatpush1.bf16.msra.mxu0 %v1020
    %1159 = vmatprep.subr.bf16.mxu0 %v1023
    %1160 = vmatpush1.bf16.msra.mxu0 %v1022
    %1161 = vmatprep.subr.bf16.mxu0 %v1025
    %1162 = vmatpush1.bf16.msra.mxu0 %v1024
    %1163 = vmatprep.subr.bf16.mxu0 %v1027
    %1164 = vmatpush1.bf16.msra.mxu0 %v1026
    %1165 = vmatprep.subr.bf16.mxu0 %v1029
    %1166 = vmatpush1.bf16.msra.mxu0 %v1028
    %1167 = vmatprep.subr.bf16.mxu0 %v1031
    %1168 = vmatpush1.bf16.msra.mxu0 %v1030
    %1169 = vmatprep.subr.bf16.mxu0 %v1033
    %1170 = vmatpush1.bf16.msra.mxu0 %v1032
    %1171 = vmatprep.subr.bf16.mxu0 %v1035
    %1172 = vmatpush1.bf16.msra.mxu0 %v1034
    %1173 = vmatprep.mubr.bf16.mxu0 %v703
    %1174 = vmatmul.mubr.bf16.gmra.mrb[0].mxu0 %v702
    %v1175 = vpop.f32.mrb[0].mxu0
    %v1176 = vadd.f32 %v1135, %v1175
    %v1177 = vpop.f32.mrb[0].mxu0
    %v1178 = vadd.f32 %v1137, %v1177
    %v1179 = vpop.f32.mrb[0].mxu0
    %v1180 = vpop.f32.mrb[0].mxu0
    %1181 = vdwg.mxu0
    %v1182 = vpack.c.bf16 %v1176, %v1176
    %v1183 = vpack.c.bf16 %v1178, %v1178
    %v1184 = vld [vmem:[%s11] sm:$0xf]
    %v1185 = vld [vmem:[%s11 + $0x4] sm:$0xf]
    %v1186 = vld [vmem:[%s11 + $0x8] sm:$0xf]
    %v1187 = vld [vmem:[%s11 + $0xc] sm:$0xf]
    %v1188 = vld [vmem:[%s11 + $0x10] sm:$0xf]
    %v1189 = vld [vmem:[%s11 + $0x14] sm:$0xf]
    %v1190 = vld [vmem:[%s11 + $0x18] sm:$0xf]
    %v1191 = vld [vmem:[%s11 + $0x1c] sm:$0xf]
    %v1192 = vld [vmem:[%s11 + $0x20] sm:$0xf]
    %v1193 = vld [vmem:[%s11 + $0x24] sm:$0xf]
    %v1194 = vld [vmem:[%s11 + $0x28] sm:$0xf]
    %v1195 = vld [vmem:[%s11 + $0x2c] sm:$0xf]
    %v1196 = vld [vmem:[%s11 + $0x30] sm:$0xf]
    %v1197 = vld [vmem:[%s11 + $0x34] sm:$0xf]
    %v1198 = vld [vmem:[%s11 + $0x38] sm:$0xf]
    %v1199 = vld [vmem:[%s11 + $0x3c] sm:$0xf]
    %v1200 = vld [vmem:[%s11 + $0x40] sm:$0xf]
    %v1201 = vld [vmem:[%s11 + $0x44] sm:$0xf]
    %v1202 = vld [vmem:[%s11 + $0x48] sm:$0xf]
    %v1203 = vld [vmem:[%s11 + $0x4c] sm:$0xf]
    %v1204 = vld [vmem:[%s11 + $0x50] sm:$0xf]
    %v1205 = vld [vmem:[%s11 + $0x54] sm:$0xf]
    %v1206 = vld [vmem:[%s11 + $0x58] sm:$0xf]
    %v1207 = vld [vmem:[%s11 + $0x5c] sm:$0xf]
    %v1208 = vld [vmem:[%s11 + $0x60] sm:$0xf]
    %v1209 = vld [vmem:[%s11 + $0x64] sm:$0xf]
    %v1210 = vld [vmem:[%s11 + $0x68] sm:$0xf]
    %v1211 = vld [vmem:[%s11 + $0x6c] sm:$0xf]
    %v1212 = vld [vmem:[%s11 + $0x70] sm:$0xf]
    %v1213 = vld [vmem:[%s11 + $0x74] sm:$0xf]
    %v1214 = vld [vmem:[%s11 + $0x78] sm:$0xf]
    %v1215 = vld [vmem:[%s11 + $0x7c] sm:$0xf]
    %v1216 = vld [vmem:[%s12] sm:$0x1]
    %v1218 = vlaneseq
    %v1219 = vshrl.u32 %v1218, 7
    %v1220 = vsub.s32 0, %v1219
    %v1221 = vrot.slane %v1216, %v1220
    %v1255 = vunpack.c.l.b16 %v1184
    %v1256 = vunpack.c.l.b16 %v1185
    %v1257 = vunpack.c.l.b16 %v1186
    %v1258 = vunpack.c.l.b16 %v1187
    %v1259 = vunpack.c.l.b16 %v1188
    %v1260 = vunpack.c.l.b16 %v1189
    %v1261 = vunpack.c.l.b16 %v1190
    %v1262 = vunpack.c.l.b16 %v1191
    %v1263 = vunpack.c.l.b16 %v1192
    %v1264 = vunpack.c.l.b16 %v1193
    %v1265 = vunpack.c.l.b16 %v1194
    %v1266 = vunpack.c.l.b16 %v1195
    %v1267 = vunpack.c.l.b16 %v1196
    %v1268 = vunpack.c.l.b16 %v1197
    %v1269 = vunpack.c.l.b16 %v1198
    %v1270 = vunpack.c.l.b16 %v1199
    %v1271 = vunpack.c.l.b16 %v1200
    %v1272 = vunpack.c.l.b16 %v1201
    %v1273 = vunpack.c.l.b16 %v1202
    %v1274 = vunpack.c.l.b16 %v1203
    %v1275 = vunpack.c.l.b16 %v1204
    %v1276 = vunpack.c.l.b16 %v1205
    %v1277 = vunpack.c.l.b16 %v1206
    %v1278 = vunpack.c.l.b16 %v1207
    %v1279 = vunpack.c.l.b16 %v1208
    %v1280 = vunpack.c.l.b16 %v1209
    %v1281 = vunpack.c.l.b16 %v1210
    %v1282 = vunpack.c.l.b16 %v1211
    %v1283 = vunpack.c.l.b16 %v1212
    %v1284 = vunpack.c.l.b16 %v1213
    %v1285 = vunpack.c.l.b16 %v1214
    %v1286 = vunpack.c.l.b16 %v1215
    %v1287 = vpack.c.b16 %v1256, %v1255
    %v1288 = vpack.c.b16 %v1258, %v1257
    %v1289 = vpack.c.b16 %v1260, %v1259
    %v1290 = vpack.c.b16 %v1262, %v1261
    %v1291 = vpack.c.b16 %v1264, %v1263
    %v1292 = vpack.c.b16 %v1266, %v1265
    %v1293 = vpack.c.b16 %v1268, %v1267
    %v1294 = vpack.c.b16 %v1270, %v1269
    %v1295 = vpack.c.b16 %v1272, %v1271
    %v1296 = vpack.c.b16 %v1274, %v1273
    %v1297 = vpack.c.b16 %v1276, %v1275
    %v1298 = vpack.c.b16 %v1278, %v1277
    %v1299 = vpack.c.b16 %v1280, %v1279
    %v1300 = vpack.c.b16 %v1282, %v1281
    %v1301 = vpack.c.b16 %v1284, %v1283
    %v1302 = vpack.c.b16 %v1286, %v1285
    %1319 = vmatprep.subr.bf16.mxu0 0
    %1320 = vmatpush1.bf16.msra.mxu0 %v1287
    %1321 = vmatprep.subr.bf16.mxu0 0
    %1322 = vmatpush1.bf16.msra.mxu0 %v1288
    %1323 = vmatprep.subr.bf16.mxu0 0
    %1324 = vmatpush1.bf16.msra.mxu0 %v1289
    %1325 = vmatprep.subr.bf16.mxu0 0
    %1326 = vmatpush1.bf16.msra.mxu0 %v1290
    %1327 = vmatprep.subr.bf16.mxu0 0
    %1328 = vmatpush1.bf16.msra.mxu0 %v1291
    %1329 = vmatprep.subr.bf16.mxu0 0
    %1330 = vmatpush1.bf16.msra.mxu0 %v1292
    %1331 = vmatprep.subr.bf16.mxu0 0
    %1332 = vmatpush1.bf16.msra.mxu0 %v1293
    %1333 = vmatprep.subr.bf16.mxu0 0
    %1334 = vmatpush1.bf16.msra.mxu0 %v1294
    %1335 = vmatprep.subr.bf16.mxu0 0
    %1336 = vmatpush1.bf16.msra.mxu0 %v1295
    %1337 = vmatprep.subr.bf16.mxu0 0
    %1338 = vmatpush1.bf16.msra.mxu0 %v1296
    %1339 = vmatprep.subr.bf16.mxu0 0
    %1340 = vmatpush1.bf16.msra.mxu0 %v1297
    %1341 = vmatprep.subr.bf16.mxu0 0
    %1342 = vmatpush1.bf16.msra.mxu0 %v1298
    %1343 = vmatprep.subr.bf16.mxu0 0
    %1344 = vmatpush1.bf16.msra.mxu0 %v1299
    %1345 = vmatprep.subr.bf16.mxu0 0
    %1346 = vmatpush1.bf16.msra.mxu0 %v1300
    %1347 = vmatprep.subr.bf16.mxu0 0
    %1348 = vmatpush1.bf16.msra.mxu0 %v1301
    %1349 = vmatprep.subr.bf16.mxu0 0
    %1350 = vmatpush1.bf16.msra.mxu0 %v1302
    %1351 = vmatprep.mubr.bf16.mxu0 %v1183
    %1352 = vmatmul.mubr.bf16.gmra.mrb[0].mxu0 %v1182
    %v1353 = vpop.f32.mrb[0].mxu0
    %v1354 = vadd.f32 %v1221, %v1353
    %v1355 = vpop.f32.mrb[0].mxu0
    %v1356 = vpop.f32.mrb[0].mxu0
    %v1357 = vpop.f32.mrb[0].mxu0
    %1358 = vdwg.mxu0
    %v1359 = vld [vmem:[%s2] sm:$0x3]
    %v1360 = vld [vmem:[%s3] sm:$0x3]
    %v1361 = vld [vmem:[%s13] sm:$0x3]
    %v1362 = vlaneseq
    %v1363 = vshrl.u32 %v1362, 7
    %v1364 = vsub.s32 0, %v1363
    %v1365 = vrot.slane %v1359, %v1364
    %1367 = vbcast.lane.b32.xlu0 %v1365, 256
    %v1368 = vpop.permute.xlu0 %1367
    %v1369 = vlaneseq
    %v1370 = vshrl.u32 %v1369, 7
    %v1371 = vsub.s32 1, %v1370
    %v1372 = vrot.slane %v1359, %v1371
    %1374 = vbcast.lane.b32.xlu0 %v1372, 256
    %v1375 = vpop.permute.xlu0 %1374
    %v1376 = vlaneseq
    %v1377 = vshrl.u32 %v1376, 7
    %v1378 = vsub.s32 0, %v1377
    %v1379 = vrot.slane %v1361, %v1378
    %v1380 = vmul.f32 %v1368, %v1379
    %v1381 = vmul.f32 %v1375, %v1379
    %v1382 = vlaneseq
    %v1383 = vshrl.u32 %v1382, 7
    %v1384 = vsub.s32 0, %v1383
    %v1385 = vrot.slane %v1360, %v1384
    %1387 = vbcast.lane.b32.xlu0 %v1385, 256
    %v1388 = vpop.permute.xlu0 %1387
    %v1389 = vlaneseq
    %v1390 = vshrl.u32 %v1389, 7
    %v1391 = vsub.s32 1, %v1390
    %v1392 = vrot.slane %v1360, %v1391
    %1394 = vbcast.lane.b32.xlu0 %v1392, 256
    %v1395 = vpop.permute.xlu0 %1394
    %v1396 = vlaneseq
    %v1397 = vshrl.u32 %v1396, 7
    %v1398 = vsub.s32 1, %v1397
    %v1399 = vrot.slane %v1361, %v1398
    %v1400 = vmul.f32 %v1388, %v1399
    %v1401 = vmul.f32 %v1395, %v1399
    %v1402 = vadd.f32 %v1380, %v1400
    %v1403 = vadd.f32 %v1381, %v1401
    %v1404 = vld [vmem:[%s14] sm:$0x1]
    %v1406 = vlaneseq
    %v1407 = vshrl.u32 %v1406, 7
    %v1408 = vsub.s32 0, %v1407
    %v1409 = vrot.slane %v1404, %v1408
    %v1411 = vadd.f32 %v1402, %v1409
    %v1412 = vadd.f32 %v1403, %v1409
    %vm1413 = vcmp.gt.f32.partialorder %v1411, 0.0
    %vm1414 = vcmp.gt.f32.partialorder %v1412, 0.0
    %v1415 = vmul.f32 %v1411, 0.01
    %v1416 = vmul.f32 %v1412, 0.01
    %v1417 = vsel %vm1413, %v1411, %v1415
    %v1418 = vsel %vm1414, %v1412, %v1416
    %v1419 = vpack.c.bf16 %v1418, %v1417
    %v1420 = vld [vmem:[%s15] sm:$0xf]
    %v1421 = vld [vmem:[%s15 + $0x4] sm:$0xf]
    %v1422 = vld [vmem:[%s15 + $0x8] sm:$0xf]
    %v1423 = vld [vmem:[%s15 + $0xc] sm:$0xf]
    %v1424 = vld [vmem:[%s15 + $0x10] sm:$0xf]
    %v1425 = vld [vmem:[%s15 + $0x14] sm:$0xf]
    %v1426 = vld [vmem:[%s15 + $0x18] sm:$0xf]
    %v1427 = vld [vmem:[%s15 + $0x1c] sm:$0xf]
    %v1428 = vld [vmem:[%s15 + $0x20] sm:$0xf]
    %v1429 = vld [vmem:[%s15 + $0x24] sm:$0xf]
    %v1430 = vld [vmem:[%s15 + $0x28] sm:$0xf]
    %v1431 = vld [vmem:[%s15 + $0x2c] sm:$0xf]
    %v1432 = vld [vmem:[%s15 + $0x30] sm:$0xf]
    %v1433 = vld [vmem:[%s15 + $0x34] sm:$0xf]
    %v1434 = vld [vmem:[%s15 + $0x38] sm:$0xf]
    %v1435 = vld [vmem:[%s15 + $0x3c] sm:$0xf]
    %v1436 = vld [vmem:[%s16] sm:$0x1]
    %v1438 = vlaneseq
    %v1439 = vshrl.u32 %v1438, 7
    %v1440 = vsub.s32 0, %v1439
    %v1441 = vrot.slane %v1436, %v1440
    %v1459 = vunpack.c.l.b16 %v1420
    %v1460 = vunpack.c.l.b16 %v1421
    %v1461 = vunpack.c.l.b16 %v1422
    %v1462 = vunpack.c.l.b16 %v1423
    %v1463 = vunpack.c.l.b16 %v1424
    %v1464 = vunpack.c.l.b16 %v1425
    %v1465 = vunpack.c.l.b16 %v1426
    %v1466 = vunpack.c.l.b16 %v1427
    %v1467 = vunpack.c.l.b16 %v1428
    %v1468 = vunpack.c.l.b16 %v1429
    %v1469 = vunpack.c.l.b16 %v1430
    %v1470 = vunpack.c.l.b16 %v1431
    %v1471 = vunpack.c.l.b16 %v1432
    %v1472 = vunpack.c.l.b16 %v1433
    %v1473 = vunpack.c.l.b16 %v1434
    %v1474 = vunpack.c.l.b16 %v1435
    %v1475 = vpack.c.b16 %v1460, %v1459
    %v1476 = vpack.c.b16 %v1462, %v1461
    %v1477 = vpack.c.b16 %v1464, %v1463
    %v1478 = vpack.c.b16 %v1466, %v1465
    %v1479 = vpack.c.b16 %v1468, %v1467
    %v1480 = vpack.c.b16 %v1470, %v1469
    %v1481 = vpack.c.b16 %v1472, %v1471
    %v1482 = vpack.c.b16 %v1474, %v1473
    %1491 = vmatprep.subr.bf16.mxu0 0
    %1492 = vmatpush1.bf16.msra.mxu0 %v1475
    %1493 = vmatprep.subr.bf16.mxu0 0
    %1494 = vmatpush1.bf16.msra.mxu0 %v1476
    %1495 = vmatprep.subr.bf16.mxu0 0
    %1496 = vmatpush1.bf16.msra.mxu0 %v1477
    %1497 = vmatprep.subr.bf16.mxu0 0
    %1498 = vmatpush1.bf16.msra.mxu0 %v1478
    %1499 = vmatprep.subr.bf16.mxu0 0
    %1500 = vmatpush1.bf16.msra.mxu0 %v1479
    %1501 = vmatprep.subr.bf16.mxu0 0
    %1502 = vmatpush1.bf16.msra.mxu0 %v1480
    %1503 = vmatprep.subr.bf16.mxu0 0
    %1504 = vmatpush1.bf16.msra.mxu0 %v1481
    %1505 = vmatprep.subr.bf16.mxu0 0
    %1506 = vmatpush1.bf16.msra.mxu0 %v1482
    %1507 = vmatprep.subr.bf16.mxu0 0
    %1508 = vmatpush1.bf16.msra.mxu0 0
    %1509 = vmatprep.subr.bf16.mxu0 0
    %1510 = vmatpush1.bf16.msra.mxu0 0
    %1511 = vmatprep.subr.bf16.mxu0 0
    %1512 = vmatpush1.bf16.msra.mxu0 0
    %1513 = vmatprep.subr.bf16.mxu0 0
    %1514 = vmatpush1.bf16.msra.mxu0 0
    %1515 = vmatprep.subr.bf16.mxu0 0
    %1516 = vmatpush1.bf16.msra.mxu0 0
    %1517 = vmatprep.subr.bf16.mxu0 0
    %1518 = vmatpush1.bf16.msra.mxu0 0
    %1519 = vmatprep.subr.bf16.mxu0 0
    %1520 = vmatpush1.bf16.msra.mxu0 0
    %1521 = vmatprep.subr.bf16.mxu0 0
    %1522 = vmatpush1.bf16.msra.mxu0 0
    %1523 = vmatprep.mubr.bf16.mxu0 0
    %1524 = vmatmul.mubr.bf16.gmra.mrb[0].mxu0 %v1419
    %v1525 = vpop.f32.mrb[0].mxu0
    %v1526 = vadd.f32 %v1441, %v1525
    %v1527 = vpop.f32.mrb[0].mxu0
    %v1528 = vpop.f32.mrb[0].mxu0
    %v1529 = vadd.f32 %v1441, %v1528
    %v1530 = vpop.f32.mrb[0].mxu0
    %1531 = vdwg.mxu0
    %v1532 = vpack.c.bf16 %v1529, %v1526
    %v1533 = vld [vmem:[%s17] sm:$0xf]
    %v1534 = vld [vmem:[%s17 + $0x4] sm:$0xf]
    %v1535 = vld [vmem:[%s17 + $0x8] sm:$0xf]
    %v1536 = vld [vmem:[%s17 + $0xc] sm:$0xf]
    %v1537 = vld [vmem:[%s17 + $0x10] sm:$0xf]
    %v1538 = vld [vmem:[%s17 + $0x14] sm:$0xf]
    %v1539 = vld [vmem:[%s17 + $0x18] sm:$0xf]
    %v1540 = vld [vmem:[%s17 + $0x1c] sm:$0xf]
    %v1541 = vld [vmem:[%s18] sm:$0x1]
    %v1543 = vlaneseq
    %v1544 = vshrl.u32 %v1543, 7
    %v1545 = vsub.s32 0, %v1544
    %v1546 = vrot.slane %v1541, %v1545
    %v1556 = vunpack.c.l.b16 %v1533
    %v1557 = vunpack.c.l.b16 %v1534
    %v1558 = vunpack.c.l.b16 %v1535
    %v1559 = vunpack.c.l.b16 %v1536
    %v1560 = vunpack.c.l.b16 %v1537
    %v1561 = vunpack.c.l.b16 %v1538
    %v1562 = vunpack.c.l.b16 %v1539
    %v1563 = vunpack.c.l.b16 %v1540
    %v1564 = vpack.c.b16 %v1557, %v1556
    %v1565 = vpack.c.b16 %v1559, %v1558
    %v1566 = vpack.c.b16 %v1561, %v1560
    %v1567 = vpack.c.b16 %v1563, %v1562
    %vm1572 = vcmask 523264
    %v1574 = vsel %vm1572, %v1532, 0
    %1576 = vmatprep.subr.bf16.mxu0 0
    %1577 = vmatpush1.bf16.msra.mxu0 %v1564
    %1578 = vmatprep.subr.bf16.mxu0 0
    %1579 = vmatpush1.bf16.msra.mxu0 %v1565
    %1580 = vmatprep.subr.bf16.mxu0 0
    %1581 = vmatpush1.bf16.msra.mxu0 %v1566
    %1582 = vmatprep.subr.bf16.mxu0 0
    %1583 = vmatpush1.bf16.msra.mxu0 %v1567
    %1584 = vmatprep.subr.bf16.mxu0 0
    %1585 = vmatpush1.bf16.msra.mxu0 0
    %1586 = vmatprep.subr.bf16.mxu0 0
    %1587 = vmatpush1.bf16.msra.mxu0 0
    %1588 = vmatprep.subr.bf16.mxu0 0
    %1589 = vmatpush1.bf16.msra.mxu0 0
    %1590 = vmatprep.subr.bf16.mxu0 0
    %1591 = vmatpush1.bf16.msra.mxu0 0
    %1592 = vmatprep.subr.bf16.mxu0 0
    %1593 = vmatpush1.bf16.msra.mxu0 0
    %1594 = vmatprep.subr.bf16.mxu0 0
    %1595 = vmatpush1.bf16.msra.mxu0 0
    %1596 = vmatprep.subr.bf16.mxu0 0
    %1597 = vmatpush1.bf16.msra.mxu0 0
    %1598 = vmatprep.subr.bf16.mxu0 0
    %1599 = vmatpush1.bf16.msra.mxu0 0
    %1600 = vmatprep.subr.bf16.mxu0 0
    %1601 = vmatpush1.bf16.msra.mxu0 0
    %1602 = vmatprep.subr.bf16.mxu0 0
    %1603 = vmatpush1.bf16.msra.mxu0 0
    %1604 = vmatprep.subr.bf16.mxu0 0
    %1605 = vmatpush1.bf16.msra.mxu0 0
    %1606 = vmatprep.subr.bf16.mxu0 0
    %1607 = vmatpush1.bf16.msra.mxu0 0
    %1608 = vmatprep.mubr.bf16.mxu0 0
    %1609 = vmatmul.mubr.bf16.gmra.mrb[0].mxu0 %v1574
    %v1610 = vpop.f32.mrb[0].mxu0
    %v1611 = vadd.f32 %v1546, %v1610
    %v1612 = vpop.f32.mrb[0].mxu0
    %v1613 = vpop.f32.mrb[0].mxu0
    %v1614 = vadd.f32 %v1546, %v1613
    %v1615 = vpop.f32.mrb[0].mxu0
    %1616 = vdwg.mxu0
    %v1619 = vunpack.c.l.s4 1966171168
    %v1620 = vunpack.c.0.s8 %v1619
    %v1621 = vlaneseq
    %v1622 = vshrl.u32 %v1621, 7
    %v1623 = vsub.s32 %v1620, %v1622
    %v1624 = vrot.slane %v1354, %v1623
    %v1625 = vcombine.high %v1624, %v1624
    %v1627 = vunpack.c.l.s4 1966171168
    %v1628 = vunpack.c.0.s8 %v1627
    %v1629 = vlaneseq
    %v1630 = vshrl.u32 %v1629, 7
    %v1631 = vsub.s32 %v1628, %v1630
    %v1632 = vrot.slane %v1624, %v1631
    %v1634 = vunpack.c.l.s4 1966171168
    %v1635 = vunpack.c.0.s8 %v1634
    %v1636 = vlaneseq
    %v1637 = vshrl.u32 %v1636, 7
    %v1638 = vsub.s32 %v1635, %v1637
    %v1639 = vrot.slane %v1625, %v1638
    %1642 = vmatprep.subr.mxu0 0.0
    %1643 = vmatpush1.xpose.msra.mxu0 %v1611
    %1644 = vmatprep.subr.mxu0 0.0
    %1645 = vmatpush1.xpose.msra.mxu0 0.0
    %1646 = vmatprep.subr.mxu0 0.0
    %1647 = vmatpush1.xpose.msra.mxu0 0.0
    %1648 = vmatprep.subr.mxu0 0.0
    %1649 = vmatpush1.xpose.msra.mxu0 0.0
    %1650 = vmatprep.subr.mxu0 0.0
    %1651 = vmatpush1.xpose.msra.mxu0 0.0
    %1652 = vmatprep.subr.mxu0 0.0
    %1653 = vmatpush1.xpose.msra.mxu0 0.0
    %1654 = vmatprep.subr.mxu0 0.0
    %1655 = vmatpush1.xpose.msra.mxu0 0.0
    %1656 = vmatprep.subr.mxu0 0.0
    %1657 = vmatpush1.xpose.msra.mxu0 0.0
    %1658 = vmatprep.subr.mxu0 0.0
    %1659 = vmatpush1.xpose.msra.mxu0 0.0
    %1660 = vmatprep.subr.mxu0 0.0
    %1661 = vmatpush1.xpose.msra.mxu0 0.0
    %1662 = vmatprep.subr.mxu0 0.0
    %1663 = vmatpush1.xpose.msra.mxu0 0.0
    %1664 = vmatprep.subr.mxu0 0.0
    %1665 = vmatpush1.xpose.msra.mxu0 0.0
    %1666 = vmatprep.subr.mxu0 0.0
    %1667 = vmatpush1.xpose.msra.mxu0 0.0
    %1668 = vmatprep.subr.mxu0 0.0
    %1669 = vmatpush1.xpose.msra.mxu0 0.0
    %1670 = vmatprep.subr.mxu0 0.0
    %1671 = vmatpush1.xpose.msra.mxu0 0.0
    %1672 = vmatprep.subr.mxu0 0.0
    %1673 = vmatpush1.xpose.msra.mxu0 0.0
    %1674 = vmatprep.subr.mxu0 0.0
    %1675 = vmatpush1.xpose.msra.mxu0 0.0
    %1676 = vmatprep.subr.mxu0 0.0
    %1677 = vmatpush1.xpose.msra.mxu0 0.0
    %1678 = vmatprep.subr.mxu0 0.0
    %1679 = vmatpush1.xpose.msra.mxu0 0.0
    %1680 = vmatprep.subr.mxu0 0.0
    %1681 = vmatpush1.xpose.msra.mxu0 0.0
    %1682 = vmatprep.subr.mxu0 0.0
    %1683 = vmatpush1.xpose.msra.mxu0 0.0
    %1684 = vmatprep.subr.mxu0 0.0
    %1685 = vmatpush1.xpose.msra.mxu0 0.0
    %1686 = vmatprep.subr.mxu0 0.0
    %1687 = vmatpush1.xpose.msra.mxu0 0.0
    %1688 = vmatprep.subr.mxu0 0.0
    %1689 = vmatpush1.xpose.msra.mxu0 0.0
    %1690 = vmatprep.subr.mxu0 0.0
    %1691 = vmatpush1.xpose.msra.mxu0 0.0
    %1692 = vmatprep.subr.mxu0 0.0
    %1693 = vmatpush1.xpose.msra.mxu0 0.0
    %1694 = vmatprep.subr.mxu0 0.0
    %1695 = vmatpush1.xpose.msra.mxu0 0.0
    %1696 = vmatprep.subr.mxu0 0.0
    %1697 = vmatpush1.xpose.msra.mxu0 0.0
    %1698 = vmatprep.subr.mxu0 0.0
    %1699 = vmatpush1.xpose.msra.mxu0 0.0
    %1700 = vmatprep.subr.mxu0 0.0
    %1701 = vmatpush1.xpose.msra.mxu0 0.0
    %1702 = vmatprep.subr.mxu0 0.0
    %1703 = vmatpush1.xpose.msra.mxu0 0.0
    %1704 = vmatprep.subr.mxu0 0.0
    %1705 = vmatpush1.xpose.msra.mxu0 0.0
    %1706 = vmatprep.mubr.f32.mxu0 0.0
    %1707 = vmatmul.mubr.f32.gmra.mrb[0].mxu0 %v1632
    %v1708 = vpop.f32.mrb[0].mxu0
    %v1709 = vadd.f32 0.0, %v1708
    %v1710 = vpop.f32.mrb[0].mxu0
    %1711 = vdwg.mxu0
    %1712 = vmatprep.subr.mxu0 0.0
    %1713 = vmatpush1.xpose.msra.mxu0 %v1614
    %1714 = vmatprep.subr.mxu0 0.0
    %1715 = vmatpush1.xpose.msra.mxu0 0.0
    %1716 = vmatprep.subr.mxu0 0.0
    %1717 = vmatpush1.xpose.msra.mxu0 0.0
    %1718 = vmatprep.subr.mxu0 0.0
    %1719 = vmatpush1.xpose.msra.mxu0 0.0
    %1720 = vmatprep.subr.mxu0 0.0
    %1721 = vmatpush1.xpose.msra.mxu0 0.0
    %1722 = vmatprep.subr.mxu0 0.0
    %1723 = vmatpush1.xpose.msra.mxu0 0.0
    %1724 = vmatprep.subr.mxu0 0.0
    %1725 = vmatpush1.xpose.msra.mxu0 0.0
    %1726 = vmatprep.subr.mxu0 0.0
    %1727 = vmatpush1.xpose.msra.mxu0 0.0
    %1728 = vmatprep.subr.mxu0 0.0
    %1729 = vmatpush1.xpose.msra.mxu0 0.0
    %1730 = vmatprep.subr.mxu0 0.0
    %1731 = vmatpush1.xpose.msra.mxu0 0.0
    %1732 = vmatprep.subr.mxu0 0.0
    %1733 = vmatpush1.xpose.msra.mxu0 0.0
    %1734 = vmatprep.subr.mxu0 0.0
    %1735 = vmatpush1.xpose.msra.mxu0 0.0
    %1736 = vmatprep.subr.mxu0 0.0
    %1737 = vmatpush1.xpose.msra.mxu0 0.0
    %1738 = vmatprep.subr.mxu0 0.0
    %1739 = vmatpush1.xpose.msra.mxu0 0.0
    %1740 = vmatprep.subr.mxu0 0.0
    %1741 = vmatpush1.xpose.msra.mxu0 0.0
    %1742 = vmatprep.subr.mxu0 0.0
    %1743 = vmatpush1.xpose.msra.mxu0 0.0
    %1744 = vmatprep.subr.mxu0 0.0
    %1745 = vmatpush1.xpose.msra.mxu0 0.0
    %1746 = vmatprep.subr.mxu0 0.0
    %1747 = vmatpush1.xpose.msra.mxu0 0.0
    %1748 = vmatprep.subr.mxu0 0.0
    %1749 = vmatpush1.xpose.msra.mxu0 0.0
    %1750 = vmatprep.subr.mxu0 0.0
    %1751 = vmatpush1.xpose.msra.mxu0 0.0
    %1752 = vmatprep.subr.mxu0 0.0
    %1753 = vmatpush1.xpose.msra.mxu0 0.0
    %1754 = vmatprep.subr.mxu0 0.0
    %1755 = vmatpush1.xpose.msra.mxu0 0.0
    %1756 = vmatprep.subr.mxu0 0.0
    %1757 = vmatpush1.xpose.msra.mxu0 0.0
    %1758 = vmatprep.subr.mxu0 0.0
    %1759 = vmatpush1.xpose.msra.mxu0 0.0
    %1760 = vmatprep.subr.mxu0 0.0
    %1761 = vmatpush1.xpose.msra.mxu0 0.0
    %1762 = vmatprep.subr.mxu0 0.0
    %1763 = vmatpush1.xpose.msra.mxu0 0.0
    %1764 = vmatprep.subr.mxu0 0.0
    %1765 = vmatpush1.xpose.msra.mxu0 0.0
    %1766 = vmatprep.subr.mxu0 0.0
    %1767 = vmatpush1.xpose.msra.mxu0 0.0
    %1768 = vmatprep.subr.mxu0 0.0
    %1769 = vmatpush1.xpose.msra.mxu0 0.0
    %1770 = vmatprep.subr.mxu0 0.0
    %1771 = vmatpush1.xpose.msra.mxu0 0.0
    %1772 = vmatprep.subr.mxu0 0.0
    %1773 = vmatpush1.xpose.msra.mxu0 0.0
    %1774 = vmatprep.subr.mxu0 0.0
    %1775 = vmatpush1.xpose.msra.mxu0 0.0
    %1776 = vmatprep.mubr.f32.mxu0 0.0
    %1777 = vmatmul.mubr.f32.gmra.mrb[0].mxu0 %v1639
    %v1778 = vpop.f32.mrb[0].mxu0
    %v1779 = vadd.f32 0.0, %v1778
    %v1780 = vpop.f32.mrb[0].mxu0
    %1781 = vdwg.mxu0
    %v1782 = vmul.f32 %v1709, 0.088388346
    %v1783 = vmul.f32 %v1779, 0.088388346
    %v1786 = vrot.slane %v1783, 7
    %vm1787 = vcmask 1041409
    %v1788 = vsel %vm1787, %v1786, %v1782
    %vm1790 = vcmask 58368
    %v1791 = vsel %vm1790, %v1788, -inf
    %1792 = vmax.xlane.f32.xlu0 %v1791
    %v1793 = vpop.xlane.xlu0 %1792
    %v1795 = vrot.slane %v1793, 1
    %v1798 = vsub.f32 %v1782, %v1793
    %v1799 = vsub.f32 %v1783, %v1795
    %v1800 = vmul.f32 %v1798, 1.442695
    %v1801 = vpow.pop %v1800
    %v1802 = vmul.f32 %v1799, 1.442695
    %v1803 = vpow.pop %v1802
    %v1806 = vrot.slane %v1803, 7
    %v1807 = vsel %vm1787, %v1806, %v1801
    %v1809 = vsel %vm1790, %v1807, 0.0
    %1810 = vadd.xlane.f32.xlu0 %v1809
    %v1811 = vpop.xlane.xlu0 %1810
    %v1813 = vrot.slane %v1811, 1
    %v1816 = vrcp.pop %v1811
    %v1817 = vmul.f32 %v1801, %v1816
    %v1818 = vrcp.pop %v1813
    %v1819 = vmul.f32 %v1803, %v1818
    %v1820 = vld [vmem:[%s4] sm:$0x3]
    %v1821 = vld [vmem:[%s5] sm:$0x3]
    %v1824 = vunpack.c.l.s4 1966171168
    %v1825 = vunpack.c.0.s8 %v1824
    %v1826 = vlaneseq
    %v1827 = vshrl.u32 %v1826, 7
    %v1828 = vsub.s32 %v1825, %v1827
    %v1829 = vrot.slane %v1820, %v1828
    %v1830 = vcombine.high %v1829, %v1829
    %v1832 = vunpack.c.l.s4 1966171168
    %v1833 = vunpack.c.0.s8 %v1832
    %v1834 = vlaneseq
    %v1835 = vshrl.u32 %v1834, 7
    %v1836 = vsub.s32 %v1833, %v1835
    %v1837 = vrot.slane %v1829, %v1836
    %v1839 = vunpack.c.l.s4 1966171168
    %v1840 = vunpack.c.0.s8 %v1839
    %v1841 = vlaneseq
    %v1842 = vshrl.u32 %v1841, 7
    %v1843 = vsub.s32 %v1840, %v1842
    %v1844 = vrot.slane %v1830, %v1843
    %v1845 = vlaneseq
    %v1846 = vshrl.u32 %v1845, 7
    %v1847 = vsub.s32 0, %v1846
    %v1848 = vrot.slane %v1837, %v1847
    %v1849 = vlaneseq
    %v1850 = vshrl.u32 %v1849, 7
    %v1851 = vsub.s32 0, %v1850
    %v1852 = vrot.slane %v1844, %v1851
    %v1855 = vsub.f32 %v1368, %v1848
    %v1856 = vsub.f32 %v1375, %v1852
    %v1859 = vunpack.c.l.s4 1966171168
    %v1860 = vunpack.c.0.s8 %v1859
    %v1861 = vlaneseq
    %v1862 = vshrl.u32 %v1861, 7
    %v1863 = vsub.s32 %v1860, %v1862
    %v1864 = vrot.slane %v1821, %v1863
    %v1865 = vcombine.high %v1864, %v1864
    %v1867 = vunpack.c.l.s4 1966171168
    %v1868 = vunpack.c.0.s8 %v1867
    %v1869 = vlaneseq
    %v1870 = vshrl.u32 %v1869, 7
    %v1871 = vsub.s32 %v1868, %v1870
    %v1872 = vrot.slane %v1864, %v1871
    %v1874 = vunpack.c.l.s4 1966171168
    %v1875 = vunpack.c.0.s8 %v1874
    %v1876 = vlaneseq
    %v1877 = vshrl.u32 %v1876, 7
    %v1878 = vsub.s32 %v1875, %v1877
    %v1879 = vrot.slane %v1865, %v1878
    %v1880 = vlaneseq
    %v1881 = vshrl.u32 %v1880, 7
    %v1882 = vsub.s32 0, %v1881
    %v1883 = vrot.slane %v1872, %v1882
    %v1884 = vlaneseq
    %v1885 = vshrl.u32 %v1884, 7
    %v1886 = vsub.s32 0, %v1885
    %v1887 = vrot.slane %v1879, %v1886
    %v1890 = vsub.f32 %v1388, %v1883
    %v1891 = vsub.f32 %v1395, %v1887
    %v1892 = vmul.f32 %v1855, %v1855
    %v1893 = vmul.f32 %v1856, %v1856
    %v1894 = vmul.f32 %v1890, %v1890
    %v1895 = vmul.f32 %v1891, %v1891
    %v1896 = vadd.f32 %v1892, %v1894
    %v1897 = vadd.f32 %v1893, %v1895
    %v1898 = vmul.f32 %v1896, -0.055555556
    %v1899 = vmul.f32 %v1897, -0.055555556
    %v1900 = vmul.f32 %v1898, 1.442695
    %v1901 = vpow.pop %v1900
    %v1902 = vmul.f32 %v1899, 1.442695
    %v1903 = vpow.pop %v1902
    %v1904 = vadd.f32 %v1820, %v1821
    %vm1905 = vcmp.ne.f32.partialorder %v1904, 0.0
    %v1906 = vsel %vm1905, 1, 0
    %v1907 = vcvt.s32.f32 %v1906
    %v1910 = vunpack.c.l.s4 1966171168
    %v1911 = vunpack.c.0.s8 %v1910
    %v1912 = vlaneseq
    %v1913 = vshrl.u32 %v1912, 7
    %v1914 = vsub.s32 %v1911, %v1913
    %v1915 = vrot.slane %v1907, %v1914
    %v1916 = vcombine.high %v1915, %v1915
    %v1918 = vunpack.c.l.s4 1966171168
    %v1919 = vunpack.c.0.s8 %v1918
    %v1920 = vlaneseq
    %v1921 = vshrl.u32 %v1920, 7
    %v1922 = vsub.s32 %v1919, %v1921
    %v1923 = vrot.slane %v1915, %v1922
    %v1925 = vunpack.c.l.s4 1966171168
    %v1926 = vunpack.c.0.s8 %v1925
    %v1927 = vlaneseq
    %v1928 = vshrl.u32 %v1927, 7
    %v1929 = vsub.s32 %v1926, %v1928
    %v1930 = vrot.slane %v1916, %v1929
    %v1931 = vlaneseq
    %v1932 = vshrl.u32 %v1931, 7
    %v1933 = vsub.s32 0, %v1932
    %v1934 = vrot.slane %v1923, %v1933
    %v1935 = vlaneseq
    %v1936 = vshrl.u32 %v1935, 7
    %v1937 = vsub.s32 0, %v1936
    %v1938 = vrot.slane %v1930, %v1937
    %v1941 = vmul.f32 %v1901, %v1934
    %v1942 = vmul.f32 %v1903, %v1938
    %vm1943 = vcmask 31744
    %v1944 = vsel %vm1943, %v1941, 0.0
    %1945 = vadd.xlane.f32.xlu0 %v1944
    %v1946 = vpop.xlane.xlu0 %1945
    %v1947 = vsel %vm1943, %v1942, 0.0
    %1948 = vadd.xlane.f32.xlu0 %v1947
    %v1949 = vpop.xlane.xlu0 %1948
    %v1952 = vlaneseq
    %v1953 = vand.u32 %v1952, 127
    %v1954 = vlaneseq
    %v1955 = vshrl.u32 %v1954, 7
    %v1956 = vsub.s32 %v1953, %v1955
    %v1957 = vrot.slane %v1946, %v1956
    %v1958 = vlaneseq
    %v1959 = vshrl.u32 %v1958, 7
    %v1960 = vsub.s32 %v1953, %v1959
    %v1961 = vrot.slane %v1949, %v1960
    %vm1962 = vcmask 1042434
    %v1963 = vsel %vm1962, %v1957, %v1957
    %vm1964 = vcmask 1043459
    %v1965 = vsel %vm1964, %v1957, %v1963
    %vm1966 = vcmask 1044484
    %v1967 = vsel %vm1966, %v1957, %v1965
    %vm1968 = vcmask 1045509
    %v1969 = vsel %vm1968, %v1957, %v1967
    %vm1970 = vcmask 1046534
    %v1971 = vsel %vm1970, %v1957, %v1969
    %vm1972 = vcmask 1047559
    %v1973 = vsel %vm1972, %v1957, %v1971
    %v1974 = vsel %vm1962, %v1961, %v1961
    %v1975 = vsel %vm1964, %v1961, %v1974
    %v1976 = vsel %vm1966, %v1961, %v1975
    %v1977 = vsel %vm1968, %v1961, %v1976
    %v1978 = vsel %vm1970, %v1961, %v1977
    %v1979 = vsel %vm1972, %v1961, %v1978
    %v1982 = vsub.f32 %v1946, %v1973
    %v1983 = vsub.f32 %v1949, %v1979
    %vm1984 = vcmp.gt.f32.partialorder %v1982, 0.0
    %vm1985 = vcmp.gt.f32.partialorder %v1983, 0.0
    %vm1986 = vcmp.lt.f32.partialorder %v1982, 0.0
    %vm1987 = vcmp.lt.f32.partialorder %v1983, 0.0
    %v1988 = vsel %vm1986, -1.0, 0.0
    %v1989 = vsel %vm1987, -1.0, 0.0
    %v1990 = vsel %vm1984, 1.0, %v1988
    %v1991 = vsel %vm1985, 1.0, %v1989
    %v1992 = vlaneseq
    %v1993 = vshrl.u32 %v1992, 7
    %v1994 = vsub.s32 0, %v1993
    %v1995 = vrot.slane %v1817, %v1994
    %1997 = vbcast.lane.b32.xlu0 %v1995, 256
    %v1998 = vpop.permute.xlu0 %1997
    %v1999 = vlaneseq
    %v2000 = vshrl.u32 %v1999, 7
    %v2001 = vsub.s32 0, %v2000
    %v2002 = vrot.slane %v1819, %v2001
    %2004 = vbcast.lane.b32.xlu0 %v2002, 256
    %v2005 = vpop.permute.xlu0 %2004
    %v2006 = vsub.f32 %v1998, %v1995
    %v2007 = vsub.f32 %v2005, %v2002
    %v2008 = vsub.f32 0.0, %v1990
    %v2009 = vsub.f32 0.0, %v1991
    %v2010 = vmul.f32 %v2008, %v2006
    %v2011 = vmul.f32 %v2009, %v2007
    %v2012 = vadd.f32 %v2010, 0.1
    %v2013 = vadd.f32 %v2011, 0.1
    %v2014 = vmax.f32 %v2012, 0.0
    %v2015 = vmax.f32 %v2013, 0.0
    %v2016 = vsel %vm161, %v2014, 0.0
    %v2017 = vsel %vm161, %v2015, 0.0
    %v2018 = vadd.f32 %v2016, %v2017
    %2019 = vadd.xlane.f32.xlu0 %v2018
    %v2020 = vpop.xlane.xlu0 %2019
    %v2021 = vrot.slane %v2020, 4
    %v2022 = vadd.f32 %v2020, %v2021
    %v2023 = vrot.slane %v2022, 2
    %v2024 = vadd.f32 %v2022, %v2023
    %v2025 = vrot.slane %v2024, 1
    %v2026 = vadd.f32 %v2024, %v2025
    %s2027 = vtos %v2026
    %v2028 = vrcp.pop 128.0
    %s2029 = vtos %v2028
    %s2030 = smul.f32 %s2027, %s2029
    %v2031 = vadd.f32 %v1817, 1e-08
    %v2032 = vadd.f32 %v1819, 1e-08
    %v2033 = vlog2.pop %v2031
    %v2034 = vmul.f32 %v2033, 0.6931472
    %v2035 = vlog2.pop %v2032
    %v2036 = vmul.f32 %v2035, 0.6931472
    %v2037 = vmul.f32 %v1817, %v2034
    %v2038 = vmul.f32 %v1819, %v2036
    %v2041 = vrot.slane %v2038, 7
    %v2042 = vsel %vm1787, %v2041, %v2037
    %v2044 = vsel %vm1790, %v2042, 0.0
    %2045 = vadd.xlane.f32.xlu0 %v2044
    %v2046 = vpop.xlane.xlu0 %2045
    %vm2047 = vcmask 1024
    %v2048 = vsel %vm2047, %v2046, 0.0
    %2049 = vadd.xlane.f32.xlu0 %v2048
    %v2050 = vpop.xlane.xlu0 %2049
    %v2051 = vrot.slane %v2050, 4
    %v2052 = vadd.f32 %v2050, %v2051
    %v2053 = vrot.slane %v2052, 2
    %v2054 = vadd.f32 %v2052, %v2053
    %v2055 = vrot.slane %v2054, 1
    %v2056 = vadd.f32 %v2054, %v2055
    %s2057 = vtos %v2056
    %v2058 = vrcp.pop 2.0
    %s2059 = vtos %v2058
    %s2060 = smul.f32 %s2057, %s2059
    %v2063 = vrot.slane %v1819, 7
    %v2064 = vsel %vm1787, %v2063, %v1817
    %2066 = vst.msk [vmem:[#allocation2] sm:$0x3] %vm1790, %v2064
    %s2067 = scalar_lea.smem [#allocation5], 0
    %2068 = sst [smem:[%s2067]] %s2060
    %s2069 = scalar_lea.smem [#allocation6], 0
    %2070 = sst [smem:[%s2069]] %s2030
    // Predicated region
    $region78: #{wp_attention_forward.1} parent=1 // pred_check
      _
    $region79: #{wp_attention_forward.1} parent=1 // pred_check_branch
      %2072 = sbr.rel (0) target = $region81
    $region80: #{wp_attention_forward.1} parent=1 // pred_region
      %s2074 = ssub.s32 32, 32
      %2075 = vsyncadd [#allocation3], %s2074
      %s2077 = sshll.u32 [#allocation2], 4
      %s2078 = int_to_ptr.vmem [resolvable:$true] %s2077
      %2080 = dma.vmem_to_hbm [thread:$0]  %s2078, 32, %s19, [#allocation3]
    $region81: #{wp_attention_forward.1} parent=1 // pred_fallthru
      _
    // Predicated region
    $region82: #{wp_attention_forward.1} parent=1 // pred_check
      _
    $region83: #{wp_attention_forward.1} parent=1 // pred_check_branch
      %2082 = sbr.rel (0) target = $region85
    $region84: #{wp_attention_forward.1} parent=1 // pred_region
      %s2084 = ssub.s32 16, 16
      %2085 = vsyncadd [#allocation4], %s2084
      %2088 = dma.smem_to_hbm [#allocation5], 16, %s20, [#allocation4]
    $region85: #{wp_attention_forward.1} parent=1 // pred_fallthru
      _
    // Predicated region
    $region86: #{wp_attention_forward.1} parent=1 // pred_check
      _
    $region87: #{wp_attention_forward.1} parent=1 // pred_check_branch
      %2090 = sbr.rel (0) target = $region89
    $region88: #{wp_attention_forward.1} parent=1 // pred_region
      %s2092 = ssub.s32 16, 16
      %2093 = vsyncadd [#allocation7], %s2092
      %2096 = dma.smem_to_hbm [#allocation6], 16, %s21, [#allocation7]
    $region89: #{wp_attention_forward.1} parent=1 // pred_fallthru
      _
    // Predicated region
    $region90: #{wp_attention_forward.1} parent=1 // pred_check
      _
    $region91: #{wp_attention_forward.1} parent=1 // pred_check_branch
      %2098 = sbr.rel (0) target = $region93
    $region92: #{wp_attention_forward.1} parent=1 // pred_region
      %2099 = dma.done [#allocation3], 32
    $region93: #{wp_attention_forward.1} parent=1 // pred_fallthru
      _
    // Predicated region
    $region94: #{wp_attention_forward.1} parent=1 // pred_check
      _
    $region95: #{wp_attention_forward.1} parent=1 // pred_check_branch
      %2101 = sbr.rel (0) target = $region97
    $region96: #{wp_attention_forward.1} parent=1 // pred_region
      %2102 = dma.done [#allocation4], 16
    $region97: #{wp_attention_forward.1} parent=1 // pred_fallthru
      _
    // Predicated region
    $region98: #{wp_attention_forward.1} parent=1 // pred_check
      _
    $region99: #{wp_attention_forward.1} parent=1 // pred_check_branch
      %2104 = sbr.rel (0) target = $region101
    $region100: #{wp_attention_forward.1} parent=1 // pred_region
      %2105 = dma.done [#allocation7], 16
    $region101: #{wp_attention_forward.1} parent=1 // pred_fallthru
      _
    %2106 = sfence
    %2107 = vsyncpa [#allocation3], 1
    %2108 = vsyncpa [#allocation4], 1
    %2109 = vsyncpa [#allocation7], 1

</llo_original>
